<compile_context>
chip_gen: v5e
topology: v5e:2x2
jax: 0.10.0
libtpu: 0.0.40
codegen_flags: <defaults>
</compile_context>

<pallas_src>
import functools

import numpy as np

import jax
import jax.numpy as jnp
from jax.experimental import pallas as pl
from jax.experimental.pallas import tpu as pltpu


def _round_up(x, m):
    return ((x + m - 1) // m) * m


def _border_masks(kh, kw, h, w, m_pad, dtype):
    """[kh*kw, m_pad] {0,1} masks.

    mask[dy*kw+dx, i*w+j] == 1 iff input sample (i+dy-ph, j+dx-pw) lies inside
    the image ('same' zero padding otherwise).  Columns >= h*w (lane padding)
    are always masked off.
    """
    ph, pw = kh // 2, kw // 2
    m = np.arange(m_pad)
    rows, cols = m // w, m % w
    in_img = m < h * w
    masks = np.zeros((kh * kw, m_pad), dtype=np.float32)
    for dy in range(kh):
        for dx in range(kw):
            rr, cc = rows + dy - ph, cols + dx - pw
            valid = in_img & (rr >= 0) & (rr < h) & (cc >= 0) & (cc < w)
            masks[dy * kw + dx] = valid.astype(np.float32)
    return jnp.asarray(masks, dtype=dtype)


def _make_kernel(kh, kw, width, m_pad, oc, compute_dtype):
    """Per-image fused conv + MFM kernel (in-kernel im2col via rolls+masks)."""
    ph, pw = kh // 2, kw // 2

    def kernel(x_ref, w1_ref, w2_ref, b1_ref, b2_ref, mask_ref, o_ref):
        # x_ref:   [1, C, m_pad]        one image, flattened spatial on lanes
        # w1/w2:   [kh*kw, oc, C]       per-offset weight slices (branch 1 / 2)
        # b1/b2:   [oc, 1] f32
        # mask:    [kh*kw, m_pad]       border masks
        # o_ref:   [1, oc, m_pad] f32
        x = x_ref[0]
        if x.dtype != compute_dtype:
            x = x.astype(compute_dtype)

        acc1 = jnp.zeros((oc, m_pad), jnp.float32)
        acc2 = jnp.zeros((oc, m_pad), jnp.float32)
        for dy in range(kh):
            for dx in range(kw):
                idx = dy * kw + dx
                shift = (dy - ph) * width + (dx - pw)
                # v[c, m] = x[c, m + shift]  (wrap-around killed by the mask)
                v = x if shift == 0 else jnp.roll(x, -shift, axis=1)
                v = v * mask_ref[idx:idx + 1, :]
                acc1 += jnp.dot(w1_ref[idx], v,
                                preferred_element_type=jnp.float32)
                acc2 += jnp.dot(w2_ref[idx], v,
                                preferred_element_type=jnp.float32)

        # f32 bias epilogue + MFM 2/1 max (pure VPU, no cross-branch slicing).
        out = jnp.maximum(acc1 + b1_ref[...], acc2 + b2_ref[...])
        o_ref[0] = out.astype(o_ref.dtype)

    return kernel


@functools.partial(jax.jit, static_argnames=("out_channels", "compute_dtype"))
def mfm_conv2d(x, weight, bias, out_channels, compute_dtype=jnp.bfloat16):
    """MFMConv2D forward.

    x:      [N, C, H, W]
    weight: [2*out_channels, C, kh, kw]   (PyTorch Conv2d OIHW layout)
    bias:   [2*out_channels]
    returns [N, out_channels, H, W] float32
    """
    n, c, h, w = x.shape
    two_oc, cw, kh, kw = weight.shape
    oc = out_channels
    assert cw == c and two_oc == 2 * oc
    # Symmetric 'same' padding matches PyTorch/lax only for odd kernels
    # (module default is 3x3).
    assert kh % 2 == 1 and kw % 2 == 1, "even-kernel 'same' padding unsupported"

    m = h * w
    m_pad = _round_up(m, 128)                 # lane-dense column axis

    # Trailing-dim reshape is a bitcast (no HBM traffic); pad only if needed.
    x2 = x.reshape(n, c, m)
    if m_pad != m:
        x2 = jnp.pad(x2, ((0, 0), (0, 0), (0, m_pad - m)))

    # Per-offset weight slices for the two MFM branches: [kh*kw, oc, C].
    w1 = jnp.transpose(weight[:oc], (2, 3, 0, 1)).reshape(kh * kw, oc, c)
    w2 = jnp.transpose(weight[oc:], (2, 3, 0, 1)).reshape(kh * kw, oc, c)
    w1 = w1.astype(compute_dtype)
    w2 = w2.astype(compute_dtype)
    b1 = bias[:oc].reshape(oc, 1).astype(jnp.float32)
    b2 = bias[oc:].reshape(oc, 1).astype(jnp.float32)

    masks = _border_masks(kh, kw, h, w, m_pad, compute_dtype)

    kernel = _make_kernel(kh, kw, w, m_pad, oc, compute_dtype)

    # VMEM budget: double-buffered streamed x block + output block + resident
    # operands, floored at the default scoped limit and capped by the actual
    # chip's VMEM (v7x: 64 MiB per core).
    xsz = jnp.dtype(x.dtype).itemsize
    csz = jnp.dtype(compute_dtype).itemsize
    need = (2 * c * m_pad * xsz                       # streamed x block
            + 2 * oc * m_pad * 4                      # f32 output block
            + 2 * (2 * kh * kw * oc * c * csz         # w1 + w2
                   + kh * kw * m_pad * csz            # masks
                   + 2 * oc * 4))                     # biases
    try:
        cap = pltpu.get_tpu_info().vmem_capacity_bytes
    except Exception:
        cap = 64 * 1024 * 1024
    vmem_limit = int(min(cap - (8 << 20), max(32 << 20, 2 * need)))

    out = pl.pallas_call(
        kernel,
        out_shape=jax.ShapeDtypeStruct((n, oc, m_pad), jnp.float32),
        grid_spec=pltpu.PrefetchScalarGridSpec(
            num_scalar_prefetch=0,
            grid=(n,),
            in_specs=[
                pl.BlockSpec((1, c, m_pad), lambda i: (i, 0, 0)),       # x
                pl.BlockSpec((kh * kw, oc, c), lambda i: (0, 0, 0)),    # w1
                pl.BlockSpec((kh * kw, oc, c), lambda i: (0, 0, 0)),    # w2
                pl.BlockSpec((oc, 1), lambda i: (0, 0)),                # b1
                pl.BlockSpec((oc, 1), lambda i: (0, 0)),                # b2
                pl.BlockSpec((kh * kw, m_pad), lambda i: (0, 0)),       # masks
            ],
            out_specs=pl.BlockSpec((1, oc, m_pad), lambda i: (i, 0, 0)),
        ),
        compiler_params=pltpu.CompilerParams(
            dimension_semantics=("parallel",),
            vmem_limit_bytes=vmem_limit),
    )(x2, w1, w2, b1, b2, masks)

    if m_pad != m:
        out = out[:, :, :m]
    return out.reshape(n, oc, h, w)       # bitcast back to NCHW


def _reference(x, weight, bias, out_channels):
    """Pure-JAX reference using lax convolution (NCHW / OIHW)."""
    y = jax.lax.conv_general_dilated(
        x, weight, window_strides=(1, 1), padding="SAME",
        dimension_numbers=("NCHW", "OIHW", "NCHW"))
    y = y + bias.reshape(1, -1, 1, 1)
    return jnp.maximum(y[:, :out_channels], y[:, out_channels:])


if __name__ == "__main__":
    key = jax.random.PRNGKey(0)
    kx, kw_, kb = jax.random.split(key, 3)

    N, C, H, W = 2, 4, 16, 16
    OUT_CH, KH, KW = 8, 3, 3

    x = jax.random.normal(kx, (N, C, H, W), dtype=jnp.float32)
    fan_in = C * KH * KW
    bound = 1.0 / float(np.sqrt(fan_in))
    weight = jax.random.uniform(kw_, (2 * OUT_CH, C, KH, KW),
                                minval=-bound, maxval=bound, dtype=jnp.float32)
    bias = jax.random.uniform(kb, (2 * OUT_CH,),
                              minval=-bound, maxval=bound, dtype=jnp.float32)

    ref = _reference(x, weight, bias, OUT_CH)

    # f32 path: matches the PyTorch module's numerics.
    out = jax.block_until_ready(
        mfm_conv2d(x, weight, bias, OUT_CH, compute_dtype=jnp.float32))
    assert out.shape == (N, OUT_CH, H, W), out.shape
    assert jnp.allclose(out, ref, atol=1e-4, rtol=1e-4), (
        float(jnp.max(jnp.abs(out - ref))))

    # Default bf16-streamed path (v6e/v7x): f32 accumulation, f32 bias epilogue.
    out_bf16 = jax.block_until_ready(mfm_conv2d(x, weight, bias, OUT_CH))
    assert out_bf16.shape == (N, OUT_CH, H, W), out_bf16.shape
    assert jnp.allclose(out_bf16, ref, atol=5e-2, rtol=5e-2), (
        float(jnp.max(jnp.abs(out_bf16 - ref))))

    print("KERNEL_OK")
</pallas_src>

<mosaic_0001>
module attributes {stable_mosaic.version = 11 : i64} {
  func.func @kernel(%arg0: i32, %arg1: memref<1x4x256xf32, #tpu.memory_space<vmem>>, %arg2: memref<9x8x4xf32, #tpu.memory_space<vmem>>, %arg3: memref<9x8x4xf32, #tpu.memory_space<vmem>>, %arg4: memref<8x1xf32, #tpu.memory_space<vmem>>, %arg5: memref<8x1xf32, #tpu.memory_space<vmem>>, %arg6: memref<9x256xf32, #tpu.memory_space<vmem>>, %arg7: memref<1x8x256xf32, #tpu.memory_space<vmem>>) attributes {dimension_semantics = [#tpu.dimension_semantics<parallel>], iteration_bounds = array<i64: 2>, scalar_prefetch = 0 : i64, scratch_operands = 0 : i64, tpu.core_type = #tpu.core_type<tc>, window_params = [{transform_indices = @transform_0, window_bounds = array<i64: 1, 4, 256>}, {pipeline_mode = #tpu.pipeline_mode<synchronous>, transform_indices = @transform_1, window_bounds = array<i64: 9, 8, 4>}, {pipeline_mode = #tpu.pipeline_mode<synchronous>, transform_indices = @transform_2, window_bounds = array<i64: 9, 8, 4>}, {pipeline_mode = #tpu.pipeline_mode<synchronous>, transform_indices = @transform_3, window_bounds = array<i64: 8, 1>}, {pipeline_mode = #tpu.pipeline_mode<synchronous>, transform_indices = @transform_4, window_bounds = array<i64: 8, 1>}, {pipeline_mode = #tpu.pipeline_mode<synchronous>, transform_indices = @transform_5, window_bounds = array<i64: 9, 256>}, {transform_indices = @transform_6, window_bounds = array<i64: 1, 8, 256>}]} {
    %c0 = arith.constant 0 : index
    %c0_0 = arith.constant 0 : index
    %c0_1 = arith.constant 0 : index
    %0 = vector.load %arg1[%c0, %c0_0, %c0_1] : memref<1x4x256xf32, #tpu.memory_space<vmem>>, vector<1x4x256xf32>
    %1 = vector.shape_cast %0 : vector<1x4x256xf32> to vector<4x256xf32>
    %cst = arith.constant 0.000000e+00 : f32
    %2 = vector.broadcast %cst : f32 to vector<8x256xf32>
    %cst_2 = arith.constant 0.000000e+00 : f32
    %3 = vector.broadcast %cst_2 : f32 to vector<8x256xf32>
    %4 = vector.extract_strided_slice %1 {offsets = [0, 239], sizes = [4, 17], strides = [1, 1]} : vector<4x256xf32> to vector<4x17xf32>
    %5 = vector.extract_strided_slice %1 {offsets = [0, 0], sizes = [4, 239], strides = [1, 1]} : vector<4x256xf32> to vector<4x239xf32>
    %6 = tpu.concatenate %4, %5 in 1 : vector<4x17xf32>, vector<4x239xf32> -> vector<4x256xf32>
    %c0_3 = arith.constant 0 : index
    %c0_4 = arith.constant 0 : index
    %7 = vector.load %arg6[%c0_3, %c0_4] : memref<9x256xf32, #tpu.memory_space<vmem>>, vector<1x256xf32>
    %8 = vector.broadcast %7 : vector<1x256xf32> to vector<4x256xf32>
    %9 = arith.mulf %6, %8 : vector<4x256xf32>
    %c0_5 = arith.constant 0 : index
    %c0_6 = arith.constant 0 : index
    %c0_7 = arith.constant 0 : index
    %10 = vector.load %arg2[%c0_5, %c0_6, %c0_7] : memref<9x8x4xf32, #tpu.memory_space<vmem>>, vector<1x8x4xf32>
    %11 = vector.shape_cast %10 : vector<1x8x4xf32> to vector<8x4xf32>
    %cst_8 = arith.constant dense<0.000000e+00> : vector<8x256xf32>
    %12 = tpu.matmul %11, %9, %cst_8 {dimension_numbers = #tpu.dot_dimension_numbers<[1], [0], [0], [1], [0, 0, 1, 1], [], []>} : vector<8x4xf32>, vector<4x256xf32>, vector<8x256xf32> -> vector<8x256xf32>
    %13 = arith.addf %2, %12 : vector<8x256xf32>
    %c0_9 = arith.constant 0 : index
    %c0_10 = arith.constant 0 : index
    %c0_11 = arith.constant 0 : index
    %14 = vector.load %arg3[%c0_9, %c0_10, %c0_11] : memref<9x8x4xf32, #tpu.memory_space<vmem>>, vector<1x8x4xf32>
    %15 = vector.shape_cast %14 : vector<1x8x4xf32> to vector<8x4xf32>
    %cst_12 = arith.constant dense<0.000000e+00> : vector<8x256xf32>
    %16 = tpu.matmul %15, %9, %cst_12 {dimension_numbers = #tpu.dot_dimension_numbers<[1], [0], [0], [1], [0, 0, 1, 1], [], []>} : vector<8x4xf32>, vector<4x256xf32>, vector<8x256xf32> -> vector<8x256xf32>
    %17 = arith.addf %3, %16 : vector<8x256xf32>
    %18 = vector.extract_strided_slice %1 {offsets = [0, 240], sizes = [4, 16], strides = [1, 1]} : vector<4x256xf32> to vector<4x16xf32>
    %19 = vector.extract_strided_slice %1 {offsets = [0, 0], sizes = [4, 240], strides = [1, 1]} : vector<4x256xf32> to vector<4x240xf32>
    %20 = tpu.concatenate %18, %19 in 1 : vector<4x16xf32>, vector<4x240xf32> -> vector<4x256xf32>
    %c1 = arith.constant 1 : index
    %c0_13 = arith.constant 0 : index
    %21 = vector.load %arg6[%c1, %c0_13] : memref<9x256xf32, #tpu.memory_space<vmem>>, vector<1x256xf32>
    %22 = vector.broadcast %21 : vector<1x256xf32> to vector<4x256xf32>
    %23 = arith.mulf %20, %22 : vector<4x256xf32>
    %c1_14 = arith.constant 1 : index
    %c0_15 = arith.constant 0 : index
    %c0_16 = arith.constant 0 : index
    %24 = vector.load %arg2[%c1_14, %c0_15, %c0_16] : memref<9x8x4xf32, #tpu.memory_space<vmem>>, vector<1x8x4xf32>
    %25 = vector.shape_cast %24 : vector<1x8x4xf32> to vector<8x4xf32>
    %cst_17 = arith.constant dense<0.000000e+00> : vector<8x256xf32>
    %26 = tpu.matmul %25, %23, %cst_17 {dimension_numbers = #tpu.dot_dimension_numbers<[1], [0], [0], [1], [0, 0, 1, 1], [], []>} : vector<8x4xf32>, vector<4x256xf32>, vector<8x256xf32> -> vector<8x256xf32>
    %27 = arith.addf %13, %26 : vector<8x256xf32>
    %c1_18 = arith.constant 1 : index
    %c0_19 = arith.constant 0 : index
    %c0_20 = arith.constant 0 : index
    %28 = vector.load %arg3[%c1_18, %c0_19, %c0_20] : memref<9x8x4xf32, #tpu.memory_space<vmem>>, vector<1x8x4xf32>
    %29 = vector.shape_cast %28 : vector<1x8x4xf32> to vector<8x4xf32>
    %cst_21 = arith.constant dense<0.000000e+00> : vector<8x256xf32>
    %30 = tpu.matmul %29, %23, %cst_21 {dimension_numbers = #tpu.dot_dimension_numbers<[1], [0], [0], [1], [0, 0, 1, 1], [], []>} : vector<8x4xf32>, vector<4x256xf32>, vector<8x256xf32> -> vector<8x256xf32>
    %31 = arith.addf %17, %30 : vector<8x256xf32>
    %32 = vector.extract_strided_slice %1 {offsets = [0, 241], sizes = [4, 15], strides = [1, 1]} : vector<4x256xf32> to vector<4x15xf32>
    %33 = vector.extract_strided_slice %1 {offsets = [0, 0], sizes = [4, 241], strides = [1, 1]} : vector<4x256xf32> to vector<4x241xf32>
    %34 = tpu.concatenate %32, %33 in 1 : vector<4x15xf32>, vector<4x241xf32> -> vector<4x256xf32>
    %c2 = arith.constant 2 : index
    %c0_22 = arith.constant 0 : index
    %35 = vector.load %arg6[%c2, %c0_22] : memref<9x256xf32, #tpu.memory_space<vmem>>, vector<1x256xf32>
    %36 = vector.broadcast %35 : vector<1x256xf32> to vector<4x256xf32>
    %37 = arith.mulf %34, %36 : vector<4x256xf32>
    %c2_23 = arith.constant 2 : index
    %c0_24 = arith.constant 0 : index
    %c0_25 = arith.constant 0 : index
    %38 = vector.load %arg2[%c2_23, %c0_24, %c0_25] : memref<9x8x4xf32, #tpu.memory_space<vmem>>, vector<1x8x4xf32>
    %39 = vector.shape_cast %38 : vector<1x8x4xf32> to vector<8x4xf32>
    %cst_26 = arith.constant dense<0.000000e+00> : vector<8x256xf32>
    %40 = tpu.matmul %39, %37, %cst_26 {dimension_numbers = #tpu.dot_dimension_numbers<[1], [0], [0], [1], [0, 0, 1, 1], [], []>} : vector<8x4xf32>, vector<4x256xf32>, vector<8x256xf32> -> vector<8x256xf32>
    %41 = arith.addf %27, %40 : vector<8x256xf32>
    %c2_27 = arith.constant 2 : index
    %c0_28 = arith.constant 0 : index
    %c0_29 = arith.constant 0 : index
    %42 = vector.load %arg3[%c2_27, %c0_28, %c0_29] : memref<9x8x4xf32, #tpu.memory_space<vmem>>, vector<1x8x4xf32>
    %43 = vector.shape_cast %42 : vector<1x8x4xf32> to vector<8x4xf32>
    %cst_30 = arith.constant dense<0.000000e+00> : vector<8x256xf32>
    %44 = tpu.matmul %43, %37, %cst_30 {dimension_numbers = #tpu.dot_dimension_numbers<[1], [0], [0], [1], [0, 0, 1, 1], [], []>} : vector<8x4xf32>, vector<4x256xf32>, vector<8x256xf32> -> vector<8x256xf32>
    %45 = arith.addf %31, %44 : vector<8x256xf32>
    %46 = vector.extract_strided_slice %1 {offsets = [0, 255], sizes = [4, 1], strides = [1, 1]} : vector<4x256xf32> to vector<4x1xf32>
    %47 = vector.extract_strided_slice %1 {offsets = [0, 0], sizes = [4, 255], strides = [1, 1]} : vector<4x256xf32> to vector<4x255xf32>
    %48 = tpu.concatenate %46, %47 in 1 : vector<4x1xf32>, vector<4x255xf32> -> vector<4x256xf32>
    %c3 = arith.constant 3 : index
    %c0_31 = arith.constant 0 : index
    %49 = vector.load %arg6[%c3, %c0_31] : memref<9x256xf32, #tpu.memory_space<vmem>>, vector<1x256xf32>
    %50 = vector.broadcast %49 : vector<1x256xf32> to vector<4x256xf32>
    %51 = arith.mulf %48, %50 : vector<4x256xf32>
    %c3_32 = arith.constant 3 : index
    %c0_33 = arith.constant 0 : index
    %c0_34 = arith.constant 0 : index
    %52 = vector.load %arg2[%c3_32, %c0_33, %c0_34] : memref<9x8x4xf32, #tpu.memory_space<vmem>>, vector<1x8x4xf32>
    %53 = vector.shape_cast %52 : vector<1x8x4xf32> to vector<8x4xf32>
    %cst_35 = arith.constant dense<0.000000e+00> : vector<8x256xf32>
    %54 = tpu.matmul %53, %51, %cst_35 {dimension_numbers = #tpu.dot_dimension_numbers<[1], [0], [0], [1], [0, 0, 1, 1], [], []>} : vector<8x4xf32>, vector<4x256xf32>, vector<8x256xf32> -> vector<8x256xf32>
    %55 = arith.addf %41, %54 : vector<8x256xf32>
    %c3_36 = arith.constant 3 : index
    %c0_37 = arith.constant 0 : index
    %c0_38 = arith.constant 0 : index
    %56 = vector.load %arg3[%c3_36, %c0_37, %c0_38] : memref<9x8x4xf32, #tpu.memory_space<vmem>>, vector<1x8x4xf32>
    %57 = vector.shape_cast %56 : vector<1x8x4xf32> to vector<8x4xf32>
    %cst_39 = arith.constant dense<0.000000e+00> : vector<8x256xf32>
    %58 = tpu.matmul %57, %51, %cst_39 {dimension_numbers = #tpu.dot_dimension_numbers<[1], [0], [0], [1], [0, 0, 1, 1], [], []>} : vector<8x4xf32>, vector<4x256xf32>, vector<8x256xf32> -> vector<8x256xf32>
    %59 = arith.addf %45, %58 : vector<8x256xf32>
    %c4 = arith.constant 4 : index
    %c0_40 = arith.constant 0 : index
    %60 = vector.load %arg6[%c4, %c0_40] : memref<9x256xf32, #tpu.memory_space<vmem>>, vector<1x256xf32>
    %61 = vector.broadcast %60 : vector<1x256xf32> to vector<4x256xf32>
    %62 = arith.mulf %1, %61 : vector<4x256xf32>
    %c4_41 = arith.constant 4 : index
    %c0_42 = arith.constant 0 : index
    %c0_43 = arith.constant 0 : index
    %63 = vector.load %arg2[%c4_41, %c0_42, %c0_43] : memref<9x8x4xf32, #tpu.memory_space<vmem>>, vector<1x8x4xf32>
    %64 = vector.shape_cast %63 : vector<1x8x4xf32> to vector<8x4xf32>
    %cst_44 = arith.constant dense<0.000000e+00> : vector<8x256xf32>
    %65 = tpu.matmul %64, %62, %cst_44 {dimension_numbers = #tpu.dot_dimension_numbers<[1], [0], [0], [1], [0, 0, 1, 1], [], []>} : vector<8x4xf32>, vector<4x256xf32>, vector<8x256xf32> -> vector<8x256xf32>
    %66 = arith.addf %55, %65 : vector<8x256xf32>
    %c4_45 = arith.constant 4 : index
    %c0_46 = arith.constant 0 : index
    %c0_47 = arith.constant 0 : index
    %67 = vector.load %arg3[%c4_45, %c0_46, %c0_47] : memref<9x8x4xf32, #tpu.memory_space<vmem>>, vector<1x8x4xf32>
    %68 = vector.shape_cast %67 : vector<1x8x4xf32> to vector<8x4xf32>
    %cst_48 = arith.constant dense<0.000000e+00> : vector<8x256xf32>
    %69 = tpu.matmul %68, %62, %cst_48 {dimension_numbers = #tpu.dot_dimension_numbers<[1], [0], [0], [1], [0, 0, 1, 1], [], []>} : vector<8x4xf32>, vector<4x256xf32>, vector<8x256xf32> -> vector<8x256xf32>
    %70 = arith.addf %59, %69 : vector<8x256xf32>
    %71 = vector.extract_strided_slice %1 {offsets = [0, 1], sizes = [4, 255], strides = [1, 1]} : vector<4x256xf32> to vector<4x255xf32>
    %72 = vector.extract_strided_slice %1 {offsets = [0, 0], sizes = [4, 1], strides = [1, 1]} : vector<4x256xf32> to vector<4x1xf32>
    %73 = tpu.concatenate %71, %72 in 1 : vector<4x255xf32>, vector<4x1xf32> -> vector<4x256xf32>
    %c5 = arith.constant 5 : index
    %c0_49 = arith.constant 0 : index
    %74 = vector.load %arg6[%c5, %c0_49] : memref<9x256xf32, #tpu.memory_space<vmem>>, vector<1x256xf32>
    %75 = vector.broadcast %74 : vector<1x256xf32> to vector<4x256xf32>
    %76 = arith.mulf %73, %75 : vector<4x256xf32>
    %c5_50 = arith.constant 5 : index
    %c0_51 = arith.constant 0 : index
    %c0_52 = arith.constant 0 : index
    %77 = vector.load %arg2[%c5_50, %c0_51, %c0_52] : memref<9x8x4xf32, #tpu.memory_space<vmem>>, vector<1x8x4xf32>
    %78 = vector.shape_cast %77 : vector<1x8x4xf32> to vector<8x4xf32>
    %cst_53 = arith.constant dense<0.000000e+00> : vector<8x256xf32>
    %79 = tpu.matmul %78, %76, %cst_53 {dimension_numbers = #tpu.dot_dimension_numbers<[1], [0], [0], [1], [0, 0, 1, 1], [], []>} : vector<8x4xf32>, vector<4x256xf32>, vector<8x256xf32> -> vector<8x256xf32>
    %80 = arith.addf %66, %79 : vector<8x256xf32>
    %c5_54 = arith.constant 5 : index
    %c0_55 = arith.constant 0 : index
    %c0_56 = arith.constant 0 : index
    %81 = vector.load %arg3[%c5_54, %c0_55, %c0_56] : memref<9x8x4xf32, #tpu.memory_space<vmem>>, vector<1x8x4xf32>
    %82 = vector.shape_cast %81 : vector<1x8x4xf32> to vector<8x4xf32>
    %cst_57 = arith.constant dense<0.000000e+00> : vector<8x256xf32>
    %83 = tpu.matmul %82, %76, %cst_57 {dimension_numbers = #tpu.dot_dimension_numbers<[1], [0], [0], [1], [0, 0, 1, 1], [], []>} : vector<8x4xf32>, vector<4x256xf32>, vector<8x256xf32> -> vector<8x256xf32>
    %84 = arith.addf %70, %83 : vector<8x256xf32>
    %85 = vector.extract_strided_slice %1 {offsets = [0, 15], sizes = [4, 241], strides = [1, 1]} : vector<4x256xf32> to vector<4x241xf32>
    %86 = vector.extract_strided_slice %1 {offsets = [0, 0], sizes = [4, 15], strides = [1, 1]} : vector<4x256xf32> to vector<4x15xf32>
    %87 = tpu.concatenate %85, %86 in 1 : vector<4x241xf32>, vector<4x15xf32> -> vector<4x256xf32>
    %c6 = arith.constant 6 : index
    %c0_58 = arith.constant 0 : index
    %88 = vector.load %arg6[%c6, %c0_58] : memref<9x256xf32, #tpu.memory_space<vmem>>, vector<1x256xf32>
    %89 = vector.broadcast %88 : vector<1x256xf32> to vector<4x256xf32>
    %90 = arith.mulf %87, %89 : vector<4x256xf32>
    %c6_59 = arith.constant 6 : index
    %c0_60 = arith.constant 0 : index
    %c0_61 = arith.constant 0 : index
    %91 = vector.load %arg2[%c6_59, %c0_60, %c0_61] : memref<9x8x4xf32, #tpu.memory_space<vmem>>, vector<1x8x4xf32>
    %92 = vector.shape_cast %91 : vector<1x8x4xf32> to vector<8x4xf32>
    %cst_62 = arith.constant dense<0.000000e+00> : vector<8x256xf32>
    %93 = tpu.matmul %92, %90, %cst_62 {dimension_numbers = #tpu.dot_dimension_numbers<[1], [0], [0], [1], [0, 0, 1, 1], [], []>} : vector<8x4xf32>, vector<4x256xf32>, vector<8x256xf32> -> vector<8x256xf32>
    %94 = arith.addf %80, %93 : vector<8x256xf32>
    %c6_63 = arith.constant 6 : index
    %c0_64 = arith.constant 0 : index
    %c0_65 = arith.constant 0 : index
    %95 = vector.load %arg3[%c6_63, %c0_64, %c0_65] : memref<9x8x4xf32, #tpu.memory_space<vmem>>, vector<1x8x4xf32>
    %96 = vector.shape_cast %95 : vector<1x8x4xf32> to vector<8x4xf32>
    %cst_66 = arith.constant dense<0.000000e+00> : vector<8x256xf32>
    %97 = tpu.matmul %96, %90, %cst_66 {dimension_numbers = #tpu.dot_dimension_numbers<[1], [0], [0], [1], [0, 0, 1, 1], [], []>} : vector<8x4xf32>, vector<4x256xf32>, vector<8x256xf32> -> vector<8x256xf32>
    %98 = arith.addf %84, %97 : vector<8x256xf32>
    %99 = vector.extract_strided_slice %1 {offsets = [0, 16], sizes = [4, 240], strides = [1, 1]} : vector<4x256xf32> to vector<4x240xf32>
    %100 = vector.extract_strided_slice %1 {offsets = [0, 0], sizes = [4, 16], strides = [1, 1]} : vector<4x256xf32> to vector<4x16xf32>
    %101 = tpu.concatenate %99, %100 in 1 : vector<4x240xf32>, vector<4x16xf32> -> vector<4x256xf32>
    %c7 = arith.constant 7 : index
    %c0_67 = arith.constant 0 : index
    %102 = vector.load %arg6[%c7, %c0_67] : memref<9x256xf32, #tpu.memory_space<vmem>>, vector<1x256xf32>
    %103 = vector.broadcast %102 : vector<1x256xf32> to vector<4x256xf32>
    %104 = arith.mulf %101, %103 : vector<4x256xf32>
    %c7_68 = arith.constant 7 : index
    %c0_69 = arith.constant 0 : index
    %c0_70 = arith.constant 0 : index
    %105 = vector.load %arg2[%c7_68, %c0_69, %c0_70] : memref<9x8x4xf32, #tpu.memory_space<vmem>>, vector<1x8x4xf32>
    %106 = vector.shape_cast %105 : vector<1x8x4xf32> to vector<8x4xf32>
    %cst_71 = arith.constant dense<0.000000e+00> : vector<8x256xf32>
    %107 = tpu.matmul %106, %104, %cst_71 {dimension_numbers = #tpu.dot_dimension_numbers<[1], [0], [0], [1], [0, 0, 1, 1], [], []>} : vector<8x4xf32>, vector<4x256xf32>, vector<8x256xf32> -> vector<8x256xf32>
    %108 = arith.addf %94, %107 : vector<8x256xf32>
    %c7_72 = arith.constant 7 : index
    %c0_73 = arith.constant 0 : index
    %c0_74 = arith.constant 0 : index
    %109 = vector.load %arg3[%c7_72, %c0_73, %c0_74] : memref<9x8x4xf32, #tpu.memory_space<vmem>>, vector<1x8x4xf32>
    %110 = vector.shape_cast %109 : vector<1x8x4xf32> to vector<8x4xf32>
    %cst_75 = arith.constant dense<0.000000e+00> : vector<8x256xf32>
    %111 = tpu.matmul %110, %104, %cst_75 {dimension_numbers = #tpu.dot_dimension_numbers<[1], [0], [0], [1], [0, 0, 1, 1], [], []>} : vector<8x4xf32>, vector<4x256xf32>, vector<8x256xf32> -> vector<8x256xf32>
    %112 = arith.addf %98, %111 : vector<8x256xf32>
    %113 = vector.extract_strided_slice %1 {offsets = [0, 17], sizes = [4, 239], strides = [1, 1]} : vector<4x256xf32> to vector<4x239xf32>
    %114 = vector.extract_strided_slice %1 {offsets = [0, 0], sizes = [4, 17], strides = [1, 1]} : vector<4x256xf32> to vector<4x17xf32>
    %115 = tpu.concatenate %113, %114 in 1 : vector<4x239xf32>, vector<4x17xf32> -> vector<4x256xf32>
    %c8 = arith.constant 8 : index
    %c0_76 = arith.constant 0 : index
    %116 = vector.load %arg6[%c8, %c0_76] : memref<9x256xf32, #tpu.memory_space<vmem>>, vector<1x256xf32>
    %117 = vector.broadcast %116 : vector<1x256xf32> to vector<4x256xf32>
    %118 = arith.mulf %115, %117 : vector<4x256xf32>
    %c8_77 = arith.constant 8 : index
    %c0_78 = arith.constant 0 : index
    %c0_79 = arith.constant 0 : index
    %119 = vector.load %arg2[%c8_77, %c0_78, %c0_79] : memref<9x8x4xf32, #tpu.memory_space<vmem>>, vector<1x8x4xf32>
    %120 = vector.shape_cast %119 : vector<1x8x4xf32> to vector<8x4xf32>
    %cst_80 = arith.constant dense<0.000000e+00> : vector<8x256xf32>
    %121 = tpu.matmul %120, %118, %cst_80 {dimension_numbers = #tpu.dot_dimension_numbers<[1], [0], [0], [1], [0, 0, 1, 1], [], []>} : vector<8x4xf32>, vector<4x256xf32>, vector<8x256xf32> -> vector<8x256xf32>
    %122 = arith.addf %108, %121 : vector<8x256xf32>
    %c8_81 = arith.constant 8 : index
    %c0_82 = arith.constant 0 : index
    %c0_83 = arith.constant 0 : index
    %123 = vector.load %arg3[%c8_81, %c0_82, %c0_83] : memref<9x8x4xf32, #tpu.memory_space<vmem>>, vector<1x8x4xf32>
    %124 = vector.shape_cast %123 : vector<1x8x4xf32> to vector<8x4xf32>
    %cst_84 = arith.constant dense<0.000000e+00> : vector<8x256xf32>
    %125 = tpu.matmul %124, %118, %cst_84 {dimension_numbers = #tpu.dot_dimension_numbers<[1], [0], [0], [1], [0, 0, 1, 1], [], []>} : vector<8x4xf32>, vector<4x256xf32>, vector<8x256xf32> -> vector<8x256xf32>
    %126 = arith.addf %112, %125 : vector<8x256xf32>
    %c0_85 = arith.constant 0 : index
    %c0_86 = arith.constant 0 : index
    %127 = vector.load %arg4[%c0_85, %c0_86] : memref<8x1xf32, #tpu.memory_space<vmem>>, vector<8x1xf32>
    %128 = vector.broadcast %127 : vector<8x1xf32> to vector<8x256xf32>
    %129 = arith.addf %122, %128 : vector<8x256xf32>
    %c0_87 = arith.constant 0 : index
    %c0_88 = arith.constant 0 : index
    %130 = vector.load %arg5[%c0_87, %c0_88] : memref<8x1xf32, #tpu.memory_space<vmem>>, vector<8x1xf32>
    %131 = vector.broadcast %130 : vector<8x1xf32> to vector<8x256xf32>
    %132 = arith.addf %126, %131 : vector<8x256xf32>
    %133 = arith.maximumf %129, %132 : vector<8x256xf32>
    %c0_89 = arith.constant 0 : index
    %c0_90 = arith.constant 0 : index
    %c0_91 = arith.constant 0 : index
    %134 = vector.load %arg7[%c0_89, %c0_90, %c0_91] : memref<1x8x256xf32, #tpu.memory_space<vmem>>, vector<1x8x256xf32>
    %135 = vector.shape_cast %134 : vector<1x8x256xf32> to vector<8x256xf32>
    %136 = vector.shape_cast %133 : vector<8x256xf32> to vector<1x8x256xf32>
    tpu.vector_store %arg7[%c0_89, %c0_90, %c0_91], %136 {strides = array<i32>} : memref<1x8x256xf32, #tpu.memory_space<vmem>>, vector<1x8x256xf32>,
    return
  }
  func.func @transform_0(%arg0: i32) -> (i32, i32, i32) {
    %c0_i32 = arith.constant 0 : i32
    %c0_i32_0 = arith.constant 0 : i32
    %c0_i32_1 = arith.constant 0 : i32
    return %arg0, %c0_i32, %c0_i32_0 : i32, i32, i32
  }
  func.func @transform_1(%arg0: i32) -> (i32, i32, i32) {
    %c0_i32 = arith.constant 0 : i32
    %c0_i32_0 = arith.constant 0 : i32
    %c0_i32_1 = arith.constant 0 : i32
    %c0_i32_2 = arith.constant 0 : i32
    return %c0_i32, %c0_i32_0, %c0_i32_1 : i32, i32, i32
  }
  func.func @transform_2(%arg0: i32) -> (i32, i32, i32) {
    %c0_i32 = arith.constant 0 : i32
    %c0_i32_0 = arith.constant 0 : i32
    %c0_i32_1 = arith.constant 0 : i32
    %c0_i32_2 = arith.constant 0 : i32
    return %c0_i32, %c0_i32_0, %c0_i32_1 : i32, i32, i32
  }
  func.func @transform_3(%arg0: i32) -> (i32, i32) {
    %c0_i32 = arith.constant 0 : i32
    %c0_i32_0 = arith.constant 0 : i32
    %c0_i32_1 = arith.constant 0 : i32
    return %c0_i32, %c0_i32_0 : i32, i32
  }
  func.func @transform_4(%arg0: i32) -> (i32, i32) {
    %c0_i32 = arith.constant 0 : i32
    %c0_i32_0 = arith.constant 0 : i32
    %c0_i32_1 = arith.constant 0 : i32
    return %c0_i32, %c0_i32_0 : i32, i32
  }
  func.func @transform_5(%arg0: i32) -> (i32, i32) {
    %c0_i32 = arith.constant 0 : i32
    %c0_i32_0 = arith.constant 0 : i32
    %c0_i32_1 = arith.constant 0 : i32
    return %c0_i32, %c0_i32_0 : i32, i32
  }
  func.func @transform_6(%arg0: i32) -> (i32, i32, i32) {
    %c0_i32 = arith.constant 0 : i32
    %c0_i32_0 = arith.constant 0 : i32
    %c0_i32_1 = arith.constant 0 : i32
    return %arg0, %c0_i32, %c0_i32_0 : i32, i32, i32
  }
}

</mosaic_0001>

<llo_original>
// kernel: mfm_conv2d.1
$region0: #{mfm_conv2d.1}
  #allocation0 [shape = 'u32[]', space=smem, size = 0x4, offset = 0x4, fixed_abs, tag = 'smem constant byte address 0x4 - core index']
  #allocation1 [shape = 'u32[72,128]{1,0:T(1,128)}', space=vmem, size = 0x9000, scoped, tag = 'internal scratch']
  %s0 = inlined_call_operand.vmem [shape: f32[2,4,256], index: 0, kind: input, shape index: {}]
  %s1 = inlined_call_operand.vmem [shape: f32[9,8,4], index: 1, kind: input, shape index: {}]
  %s2 = inlined_call_operand.vmem [shape: f32[9,8,4], index: 2, kind: input, shape index: {}]
  %s3 = inlined_call_operand.vmem [shape: f32[8,1], index: 3, kind: input, shape index: {}]
  %s4 = inlined_call_operand.vmem [shape: f32[8,1], index: 4, kind: input, shape index: {}]
  %s5 = inlined_call_operand.vmem [shape: f32[9,256], index: 5, kind: input, shape index: {}]
  %s6 = inlined_call_operand.vmem [shape: f32[2,8,256], index: 6, kind: output, shape index: {}]
  %s7 = sld [smem:[#allocation0]]
  $region57: #{mfm_conv2d.1} parent=0
    _
  %s9 = ssub.s32 1, %s7
  %s10 = scalar_select 0, %s9, %s7
  loop: start=0, step=1, limit=4
  $region2: #{mfm_conv2d.1} parent=0 // loop_pre_header
    _
  $region3: #{mfm_conv2d.1} parent=0 // loop_header
    %s12 = sphi 0, %s16
    %p13 = scmp.ge.s32.totalorder %s12, 4
    %s22 = sphi 0, %s24
    %s25 = sphi 0, %s22
    %s26 = sphi 0, %s25
    %s42 = sphi 0, %s26
    %s46 = sphi 0, %s46
    %s48 = sphi 0, %s46
    %s49 = sphi 0, %s48
    %s63 = sphi 0, %s49
    %s67 = sphi 0, %s67
    %s69 = sphi 0, %s67
    %s70 = sphi 0, %s69
    %s84 = sphi 0, %s70
    %s88 = sphi 0, %s88
    %s90 = sphi 0, %s88
    %s91 = sphi 0, %s90
    %s105 = sphi 0, %s91
    %s109 = sphi 0, %s109
    %s111 = sphi 0, %s109
    %s112 = sphi 0, %s111
    %s126 = sphi 0, %s112
    %s130 = sphi 0, %s130
    %s132 = sphi 0, %s130
    %s133 = sphi 0, %s132
    %s147 = sphi 0, %s133
    %s153 = sphi 0, %s155
    %s156 = sphi 0, %s153
    %s157 = sphi 0, %s156
    %s173 = sphi 0, %s157
  $region4: #{mfm_conv2d.1} parent=0 // loop_header_branch
    %15 = sbr.rel (%p13) target = $region8
  $region5: #{mfm_conv2d.1} parent=0 // loop_body
    %s17 = ssub.s32 %s12, 1
    %s18 = ssub.s32 %s12, 2
    %s19 = sadd.s32 %s12, 1
    %s20 = ssub.s32 %s12, %s19
    %p21 = scmp.eq.s32.totalorder %s20, 0
    %s23 = sadd.s32 %s22, 1
    %s24 = scalar_select %p21, %s22, %s23
    %p27 = pneg %p21
    %p28 = scmp.eq.s32.totalorder %s12, 1
    %p29 = por %p27, %p28
    %p30 = scmp.ne.s32.totalorder %s22, %s25
    %p31 = scmp.eq.s32.totalorder %s12, 0
    %p32 = por %p30, %p31
    %p33 = scmp.ne.s32.totalorder %s22, %s25
    %p34 = scmp.eq.s32.totalorder %s17, 1
    %p35 = por %p33, %p34
    %p36 = scmp.ne.s32.totalorder %s25, %s26
    %p37 = scmp.eq.s32.totalorder %s17, 0
    %p38 = por %p36, %p37
    %p39 = scmp.ne.s32.totalorder %s25, %s26
    %p40 = scmp.eq.s32.totalorder %s18, 1
    %p41 = por %p39, %p40
    %p43 = scmp.ne.s32.totalorder %s26, %s42
    %p44 = scmp.eq.s32.totalorder %s18, 0
    %p45 = por %p43, %p44
    %s47 = sadd.s32 %s46, 1
    %p50 = scmp.eq.s32.totalorder %s12, 1
    %p51 = scmp.ne.s32.totalorder %s46, %s48
    %p52 = scmp.eq.s32.totalorder %s12, 0
    %p53 = por %p51, %p52
    %p54 = scmp.ne.s32.totalorder %s46, %s48
    %p55 = scmp.eq.s32.totalorder %s17, 1
    %p56 = por %p54, %p55
    %p57 = scmp.ne.s32.totalorder %s48, %s49
    %p58 = scmp.eq.s32.totalorder %s17, 0
    %p59 = por %p57, %p58
    %p60 = scmp.ne.s32.totalorder %s48, %s49
    %p61 = scmp.eq.s32.totalorder %s18, 1
    %p62 = por %p60, %p61
    %p64 = scmp.ne.s32.totalorder %s49, %s63
    %p65 = scmp.eq.s32.totalorder %s18, 0
    %p66 = por %p64, %p65
    %s68 = sadd.s32 %s67, 1
    %p71 = scmp.eq.s32.totalorder %s12, 1
    %p72 = scmp.ne.s32.totalorder %s67, %s69
    %p73 = scmp.eq.s32.totalorder %s12, 0
    %p74 = por %p72, %p73
    %p75 = scmp.ne.s32.totalorder %s67, %s69
    %p76 = scmp.eq.s32.totalorder %s17, 1
    %p77 = por %p75, %p76
    %p78 = scmp.ne.s32.totalorder %s69, %s70
    %p79 = scmp.eq.s32.totalorder %s17, 0
    %p80 = por %p78, %p79
    %p81 = scmp.ne.s32.totalorder %s69, %s70
    %p82 = scmp.eq.s32.totalorder %s18, 1
    %p83 = por %p81, %p82
    %p85 = scmp.ne.s32.totalorder %s70, %s84
    %p86 = scmp.eq.s32.totalorder %s18, 0
    %p87 = por %p85, %p86
    %s89 = sadd.s32 %s88, 1
    %p92 = scmp.eq.s32.totalorder %s12, 1
    %p93 = scmp.ne.s32.totalorder %s88, %s90
    %p94 = scmp.eq.s32.totalorder %s12, 0
    %p95 = por %p93, %p94
    %p96 = scmp.ne.s32.totalorder %s88, %s90
    %p97 = scmp.eq.s32.totalorder %s17, 1
    %p98 = por %p96, %p97
    %p99 = scmp.ne.s32.totalorder %s90, %s91
    %p100 = scmp.eq.s32.totalorder %s17, 0
    %p101 = por %p99, %p100
    %p102 = scmp.ne.s32.totalorder %s90, %s91
    %p103 = scmp.eq.s32.totalorder %s18, 1
    %p104 = por %p102, %p103
    %p106 = scmp.ne.s32.totalorder %s91, %s105
    %p107 = scmp.eq.s32.totalorder %s18, 0
    %p108 = por %p106, %p107
    %s110 = sadd.s32 %s109, 1
    %p113 = scmp.eq.s32.totalorder %s12, 1
    %p114 = scmp.ne.s32.totalorder %s109, %s111
    %p115 = scmp.eq.s32.totalorder %s12, 0
    %p116 = por %p114, %p115
    %p117 = scmp.ne.s32.totalorder %s109, %s111
    %p118 = scmp.eq.s32.totalorder %s17, 1
    %p119 = por %p117, %p118
    %p120 = scmp.ne.s32.totalorder %s111, %s112
    %p121 = scmp.eq.s32.totalorder %s17, 0
    %p122 = por %p120, %p121
    %p123 = scmp.ne.s32.totalorder %s111, %s112
    %p124 = scmp.eq.s32.totalorder %s18, 1
    %p125 = por %p123, %p124
    %p127 = scmp.ne.s32.totalorder %s112, %s126
    %p128 = scmp.eq.s32.totalorder %s18, 0
    %p129 = por %p127, %p128
    %s131 = sadd.s32 %s130, 1
    %p134 = scmp.eq.s32.totalorder %s12, 1
    %p135 = scmp.ne.s32.totalorder %s130, %s132
    %p136 = scmp.eq.s32.totalorder %s12, 0
    %p137 = por %p135, %p136
    %p138 = scmp.ne.s32.totalorder %s130, %s132
    %p139 = scmp.eq.s32.totalorder %s17, 1
    %p140 = por %p138, %p139
    %p141 = scmp.ne.s32.totalorder %s132, %s133
    %p142 = scmp.eq.s32.totalorder %s17, 0
    %p143 = por %p141, %p142
    %p144 = scmp.ne.s32.totalorder %s132, %s133
    %p145 = scmp.eq.s32.totalorder %s18, 1
    %p146 = por %p144, %p145
    %p148 = scmp.ne.s32.totalorder %s133, %s147
    %p149 = scmp.eq.s32.totalorder %s18, 0
    %p150 = por %p148, %p149
    %s151 = ssub.s32 %s12, %s19
    %p152 = scmp.eq.s32.totalorder %s151, 0
    %s154 = sadd.s32 %s153, 1
    %s155 = scalar_select %p152, %s153, %s154
    %p158 = pneg %p152
    %p159 = scmp.eq.s32.totalorder %s12, 1
    %p160 = por %p158, %p159
    %p161 = scmp.ne.s32.totalorder %s153, %s156
    %p162 = scmp.eq.s32.totalorder %s12, 0
    %p163 = por %p161, %p162
    %p164 = scmp.ne.s32.totalorder %s153, %s156
    %p165 = scmp.eq.s32.totalorder %s17, 1
    %p166 = por %p164, %p165
    %p167 = scmp.ne.s32.totalorder %s156, %s157
    %p168 = scmp.eq.s32.totalorder %s17, 0
    %p169 = por %p167, %p168
    %p170 = scmp.ne.s32.totalorder %s156, %s157
    %p171 = scmp.eq.s32.totalorder %s18, 1
    %p172 = por %p170, %p171
    %p174 = scmp.ne.s32.totalorder %s157, %s173
    %p175 = scmp.eq.s32.totalorder %s18, 0
    %p176 = por %p174, %p175
    %p177 = scmp.le.s32.totalorder 1, %s12
    %p178 = scmp.lt.s32.totalorder %s12, 3
    %p179 = pnand %p177, %p178
    %p180 = pneg %p179
    // Predicated region
    $region9: #{mfm_conv2d.1} parent=5 // pred_check
      _
    $region10: #{mfm_conv2d.1} parent=5 // pred_check_branch
      %182 = sbr.rel (%p179) target = $region12
    $region11: #{mfm_conv2d.1} parent=5 // pred_region
      %s183 = ssub.s32 %s12, 1
      // Predicated region
      $region13: #{mfm_conv2d.1} parent=11 // pred_check
        %p184 = pneg %p59
      $region14: #{mfm_conv2d.1} parent=11 // pred_check_branch
        %186 = sbr.rel (%p184) target = $region16
      $region15: #{mfm_conv2d.1} parent=11 // pred_region
        _
      $region16: #{mfm_conv2d.1} parent=11 // pred_fallthru
        _
      // Predicated region
      $region17: #{mfm_conv2d.1} parent=11 // pred_check
        %p187 = pneg %p80
      $region18: #{mfm_conv2d.1} parent=11 // pred_check_branch
        %189 = sbr.rel (%p187) target = $region20
      $region19: #{mfm_conv2d.1} parent=11 // pred_region
        _
      $region20: #{mfm_conv2d.1} parent=11 // pred_fallthru
        _
      // Predicated region
      $region21: #{mfm_conv2d.1} parent=11 // pred_check
        %p190 = pneg %p101
      $region22: #{mfm_conv2d.1} parent=11 // pred_check_branch
        %192 = sbr.rel (%p190) target = $region24
      $region23: #{mfm_conv2d.1} parent=11 // pred_region
        _
      $region24: #{mfm_conv2d.1} parent=11 // pred_fallthru
        _
      // Predicated region
      $region25: #{mfm_conv2d.1} parent=11 // pred_check
        %p193 = pneg %p122
      $region26: #{mfm_conv2d.1} parent=11 // pred_check_branch
        %195 = sbr.rel (%p193) target = $region28
      $region27: #{mfm_conv2d.1} parent=11 // pred_region
        _
      $region28: #{mfm_conv2d.1} parent=11 // pred_fallthru
        _
      // Predicated region
      $region29: #{mfm_conv2d.1} parent=11 // pred_check
        %p196 = pneg %p143
      $region30: #{mfm_conv2d.1} parent=11 // pred_check_branch
        %198 = sbr.rel (%p196) target = $region32
      $region31: #{mfm_conv2d.1} parent=11 // pred_region
        _
      $region32: #{mfm_conv2d.1} parent=11 // pred_fallthru
        _
    $region12: #{mfm_conv2d.1} parent=5 // pred_fallthru
      _
    %p199 = scmp.lt.s32.totalorder %s12, 2
    // Predicated region
    $region33: #{mfm_conv2d.1} parent=5 // pred_check
      %p200 = pneg %p199
    $region34: #{mfm_conv2d.1} parent=5 // pred_check_branch
      %202 = sbr.rel (%p200) target = $region36
    $region35: #{mfm_conv2d.1} parent=5 // pred_region
      // Predicated region
      $region37: #{mfm_conv2d.1} parent=35 // pred_check
        %p203 = pneg %p32
      $region38: #{mfm_conv2d.1} parent=35 // pred_check_branch
        %205 = sbr.rel (%p203) target = $region40
      $region39: #{mfm_conv2d.1} parent=35 // pred_region
        %p206 = scmp.lt.s32.totalorder %s12, 1
        %s207 = scalar_select %p206, %s12, 1
        %s208 = smul.addr %s207, 2
        %s209 = smul.addr %s208, 4
        %s210 = scalar_lea.vmem %s0, %s209
      $region40: #{mfm_conv2d.1} parent=35 // pred_fallthru
        _
    $region36: #{mfm_conv2d.1} parent=5 // pred_fallthru
      _
    %p211 = scmp.le.s32.totalorder 1, %s12
    %p212 = scmp.lt.s32.totalorder %s12, 3
    %p213 = pnand %p211, %p212
    %p214 = pneg %p213
    // Predicated region
    $region41: #{mfm_conv2d.1} parent=5 // pred_check
      _
    $region42: #{mfm_conv2d.1} parent=5 // pred_check_branch
      %216 = sbr.rel (%p213) target = $region44
    $region43: #{mfm_conv2d.1} parent=5 // pred_region
      %s217 = ssub.s32 %s12, 1
      %p218 = scmp.lt.s32.totalorder %s17, 1
      %s219 = scalar_select %p218, %s17, 1
      %s220 = smul.addr %s219, 2
      %s221 = smul.addr %s220, 4
      %s222 = scalar_lea.vmem %s0, %s221
      %p223 = pneg %p38
      %p224 = pneg %p35
      %p225 = pneg %p59
      %p226 = pneg %p56
      %p227 = pneg %p80
      %p228 = pneg %p77
      %p229 = pneg %p101
      %p230 = pneg %p98
      %p231 = pneg %p122
      %p232 = pneg %p119
      %p233 = pneg %p143
      %p234 = pneg %p140
      %p235 = pneg %p169
      %p236 = pneg %p166
      %p237 = scmp.lt.s32.totalorder %s17, 1
      %s238 = scalar_select %p237, %s17, 1
      %s239 = smul.addr %s238, 2
      %s240 = smul.addr %s239, 8
      %s241 = scalar_lea.vmem %s6, %s240
      %p242 = scmp.lt.s32.totalorder %s17, 1
      %s243 = scalar_select %p242, %s17, 1
      %s244 = smul.addr %s243, 2
      %s245 = smul.addr %s244, 4
      %s246 = scalar_lea.vmem %s0, %s245
      %p247 = scmp.lt.s32.totalorder %s17, 1
      %s248 = scalar_select %p247, %s17, 1
      %s249 = smul.addr %s248, 2
      %s250 = smul.addr %s249, 8
      %s251 = scalar_lea.vmem %s6, %s250
      %v252 = vld [vmem:[%s246] sm:$0xff]
      %254 = vst [vmem:[#allocation1] ss:$2 sm:$0xff] %v252
      %v255 = vld.sshfl [vmem:[#allocation1 + $0x8] sm:$0xff pattern:$0x75316420]
      %256 = vrot.lane.b32.xlu0 %v255, 17
      %v257 = vpop.permute.xlu0 %256
      %259 = vst [vmem:[#allocation1] ss:$2 sm:$0xff] %v252
      %v260 = vld.sshfl [vmem:[#allocation1] sm:$0xff pattern:$0x75316420]
      %v261 = vld.sshfl [vmem:[#allocation1 + $0x8] sm:$0xff pattern:$0x75316420]
      %262 = vrot.lane.b32.xlu0 %v260, 17
      %v263 = vpop.permute.xlu0 %262
      %264 = vrot.lane.b32.xlu0 %v261, 17
      %v265 = vpop.permute.xlu0 %264
      %vm266 = vcmask 138240
      %v267 = vsel %vm266, %v263, %v265
      %v270 = vsel %vm266, %v257, %v263
      %v271 = vld [vmem:[%s5] ss:$8 sm:$0x3]
      %v273 = vperm.slane %v271, 0
      %v274 = vperm.slane %v271, 1
      %v277 = vmul.f32 %v270, %v273
      %v278 = vmul.f32 %v267, %v274
      %v279 = vld [vmem:[%s1] sm:$0xff]
      %v280 = vld [vmem:[%s2] sm:$0xff]
      %281 = vst [vmem:[#allocation1] ss:$2 sm:$0xff] %v252
      %v282 = vld.sshfl [vmem:[#allocation1 + $0x8] sm:$0xff pattern:$0x75316420]
      %283 = vrot.lane.b32.xlu0 %v282, 16
      %v284 = vpop.permute.xlu0 %283
      %286 = vst [vmem:[#allocation1] ss:$2 sm:$0xff] %v252
      %v287 = vld.sshfl [vmem:[#allocation1] sm:$0xff pattern:$0x75316420]
      %v288 = vld.sshfl [vmem:[#allocation1 + $0x8] sm:$0xff pattern:$0x75316420]
      %289 = vrot.lane.b32.xlu0 %v287, 16
      %v290 = vpop.permute.xlu0 %289
      %291 = vrot.lane.b32.xlu0 %v288, 16
      %v292 = vpop.permute.xlu0 %291
      %vm293 = vcmask 130048
      %v294 = vsel %vm293, %v290, %v292
      %v297 = vsel %vm293, %v284, %v290
      %s298 = scalar_lea.vmem %s5, 1
      %v299 = vld [vmem:[%s298] ss:$8 sm:$0x3]
      %v301 = vperm.slane %v299, 0
      %v302 = vperm.slane %v299, 1
      %v305 = vmul.f32 %v297, %v301
      %v306 = vmul.f32 %v294, %v302
      %s307 = scalar_lea.vmem %s1, 8
      %v308 = vld [vmem:[%s307] sm:$0xff]
      %vm309 = vcmask 31744
      %v311 = vsel %vm309, %v308, 0
      %vm313 = vcmask 1043456
      %v315 = vsel %vm313, %v305, 0
      %v318 = vsel %vm313, %v306, 0
      %320 = vmatpush.msra.mxu0 0.0
      %321 = vmatpush.msra.mxu0 0.0
      %322 = vmatpush.msra.mxu0 0.0
      %323 = vmatpush.msra.mxu0 0.0
      %324 = vmatpush.msra.mxu0 0.0
      %325 = vmatpush.msra.mxu0 0.0
      %326 = vmatpush.msra.mxu0 0.0
      %327 = vmatpush.msra.mxu0 0.0
      %328 = vmatpush.msra.mxu0 0.0
      %329 = vmatpush.msra.mxu0 0.0
      %330 = vmatpush.msra.mxu0 0.0
      %331 = vmatpush.msra.mxu0 0.0
      %332 = vmatpush.msra.mxu0 0.0
      %333 = vmatpush.msra.mxu0 0.0
      %334 = vmatpush.msra.mxu0 0.0
      %335 = vmatpush.msra.mxu0 %v315
      %336 = vmatmul.f32.gmra.mxu0 %v311
      %v337 = vpop.f32.mrf.mxu0
      %v338 = vadd.f32 0.0, %v337
      %339 = vdwg.mxu0
      %340 = vmatpush.msra.mxu0 0.0
      %341 = vmatpush.msra.mxu0 0.0
      %342 = vmatpush.msra.mxu0 0.0
      %343 = vmatpush.msra.mxu0 0.0
      %344 = vmatpush.msra.mxu0 0.0
      %345 = vmatpush.msra.mxu0 0.0
      %346 = vmatpush.msra.mxu0 0.0
      %347 = vmatpush.msra.mxu0 0.0
      %348 = vmatpush.msra.mxu0 0.0
      %349 = vmatpush.msra.mxu0 0.0
      %350 = vmatpush.msra.mxu0 0.0
      %351 = vmatpush.msra.mxu0 0.0
      %352 = vmatpush.msra.mxu0 0.0
      %353 = vmatpush.msra.mxu0 0.0
      %354 = vmatpush.msra.mxu0 0.0
      %355 = vmatpush.msra.mxu0 %v318
      %356 = vmatmul.f32.gmra.mxu0 %v311
      %v357 = vpop.f32.mrf.mxu0
      %v358 = vadd.f32 0.0, %v357
      %359 = vdwg.mxu0
      %v361 = vsel %vm309, %v279, 0
      %v364 = vsel %vm313, %v277, 0
      %v367 = vsel %vm313, %v278, 0
      %369 = vmatpush.msra.mxu0 0.0
      %370 = vmatpush.msra.mxu0 0.0
      %371 = vmatpush.msra.mxu0 0.0
      %372 = vmatpush.msra.mxu0 0.0
      %373 = vmatpush.msra.mxu0 0.0
      %374 = vmatpush.msra.mxu0 0.0
      %375 = vmatpush.msra.mxu0 0.0
      %376 = vmatpush.msra.mxu0 0.0
      %377 = vmatpush.msra.mxu0 0.0
      %378 = vmatpush.msra.mxu0 0.0
      %379 = vmatpush.msra.mxu0 0.0
      %380 = vmatpush.msra.mxu0 0.0
      %381 = vmatpush.msra.mxu0 0.0
      %382 = vmatpush.msra.mxu0 0.0
      %383 = vmatpush.msra.mxu0 0.0
      %384 = vmatpush.msra.mxu0 %v364
      %385 = vmatmul.f32.gmra.mxu0 %v361
      %v386 = vpop.f32.mrf.mxu0
      %v387 = vadd.f32 %v338, %v386
      %388 = vdwg.mxu0
      %389 = vmatpush.msra.mxu0 0.0
      %390 = vmatpush.msra.mxu0 0.0
      %391 = vmatpush.msra.mxu0 0.0
      %392 = vmatpush.msra.mxu0 0.0
      %393 = vmatpush.msra.mxu0 0.0
      %394 = vmatpush.msra.mxu0 0.0
      %395 = vmatpush.msra.mxu0 0.0
      %396 = vmatpush.msra.mxu0 0.0
      %397 = vmatpush.msra.mxu0 0.0
      %398 = vmatpush.msra.mxu0 0.0
      %399 = vmatpush.msra.mxu0 0.0
      %400 = vmatpush.msra.mxu0 0.0
      %401 = vmatpush.msra.mxu0 0.0
      %402 = vmatpush.msra.mxu0 0.0
      %403 = vmatpush.msra.mxu0 0.0
      %404 = vmatpush.msra.mxu0 %v367
      %405 = vmatmul.f32.gmra.mxu0 %v361
      %v406 = vpop.f32.mrf.mxu0
      %v407 = vadd.f32 %v358, %v406
      %408 = vdwg.mxu0
      %s409 = scalar_lea.vmem %s2, 8
      %v410 = vld [vmem:[%s409] sm:$0xff]
      %v412 = vsel %vm309, %v410, 0
      %414 = vmatpush.msra.mxu0 0.0
      %415 = vmatpush.msra.mxu0 0.0
      %416 = vmatpush.msra.mxu0 0.0
      %417 = vmatpush.msra.mxu0 0.0
      %418 = vmatpush.msra.mxu0 0.0
      %419 = vmatpush.msra.mxu0 0.0
      %420 = vmatpush.msra.mxu0 0.0
      %421 = vmatpush.msra.mxu0 0.0
      %422 = vmatpush.msra.mxu0 0.0
      %423 = vmatpush.msra.mxu0 0.0
      %424 = vmatpush.msra.mxu0 0.0
      %425 = vmatpush.msra.mxu0 0.0
      %426 = vmatpush.msra.mxu0 0.0
      %427 = vmatpush.msra.mxu0 0.0
      %428 = vmatpush.msra.mxu0 0.0
      %429 = vmatpush.msra.mxu0 %v315
      %430 = vmatmul.f32.gmra.mxu0 %v412
      %v431 = vpop.f32.mrf.mxu0
      %v432 = vadd.f32 0.0, %v431
      %433 = vdwg.mxu0
      %434 = vmatpush.msra.mxu0 0.0
      %435 = vmatpush.msra.mxu0 0.0
      %436 = vmatpush.msra.mxu0 0.0
      %437 = vmatpush.msra.mxu0 0.0
      %438 = vmatpush.msra.mxu0 0.0
      %439 = vmatpush.msra.mxu0 0.0
      %440 = vmatpush.msra.mxu0 0.0
      %441 = vmatpush.msra.mxu0 0.0
      %442 = vmatpush.msra.mxu0 0.0
      %443 = vmatpush.msra.mxu0 0.0
      %444 = vmatpush.msra.mxu0 0.0
      %445 = vmatpush.msra.mxu0 0.0
      %446 = vmatpush.msra.mxu0 0.0
      %447 = vmatpush.msra.mxu0 0.0
      %448 = vmatpush.msra.mxu0 0.0
      %449 = vmatpush.msra.mxu0 %v318
      %450 = vmatmul.f32.gmra.mxu0 %v412
      %v451 = vpop.f32.mrf.mxu0
      %v452 = vadd.f32 0.0, %v451
      %453 = vdwg.mxu0
      %v455 = vsel %vm309, %v280, 0
      %457 = vmatpush.msra.mxu0 0.0
      %458 = vmatpush.msra.mxu0 0.0
      %459 = vmatpush.msra.mxu0 0.0
      %460 = vmatpush.msra.mxu0 0.0
      %461 = vmatpush.msra.mxu0 0.0
      %462 = vmatpush.msra.mxu0 0.0
      %463 = vmatpush.msra.mxu0 0.0
      %464 = vmatpush.msra.mxu0 0.0
      %465 = vmatpush.msra.mxu0 0.0
      %466 = vmatpush.msra.mxu0 0.0
      %467 = vmatpush.msra.mxu0 0.0
      %468 = vmatpush.msra.mxu0 0.0
      %469 = vmatpush.msra.mxu0 0.0
      %470 = vmatpush.msra.mxu0 0.0
      %471 = vmatpush.msra.mxu0 0.0
      %472 = vmatpush.msra.mxu0 %v364
      %473 = vmatmul.f32.gmra.mxu0 %v455
      %v474 = vpop.f32.mrf.mxu0
      %v475 = vadd.f32 %v432, %v474
      %476 = vdwg.mxu0
      %477 = vmatpush.msra.mxu0 0.0
      %478 = vmatpush.msra.mxu0 0.0
      %479 = vmatpush.msra.mxu0 0.0
      %480 = vmatpush.msra.mxu0 0.0
      %481 = vmatpush.msra.mxu0 0.0
      %482 = vmatpush.msra.mxu0 0.0
      %483 = vmatpush.msra.mxu0 0.0
      %484 = vmatpush.msra.mxu0 0.0
      %485 = vmatpush.msra.mxu0 0.0
      %486 = vmatpush.msra.mxu0 0.0
      %487 = vmatpush.msra.mxu0 0.0
      %488 = vmatpush.msra.mxu0 0.0
      %489 = vmatpush.msra.mxu0 0.0
      %490 = vmatpush.msra.mxu0 0.0
      %491 = vmatpush.msra.mxu0 0.0
      %492 = vmatpush.msra.mxu0 %v367
      %493 = vmatmul.f32.gmra.mxu0 %v455
      %v494 = vpop.f32.mrf.mxu0
      %v495 = vadd.f32 %v452, %v494
      %496 = vdwg.mxu0
      %497 = vst [vmem:[#allocation1] ss:$2 sm:$0xff] %v252
      %v498 = vld.sshfl [vmem:[#allocation1 + $0x8] sm:$0xff pattern:$0x75316420]
      %499 = vrot.lane.b32.xlu0 %v498, 15
      %v500 = vpop.permute.xlu0 %499
      %502 = vst [vmem:[#allocation1] ss:$2 sm:$0xff] %v252
      %v503 = vld.sshfl [vmem:[#allocation1] sm:$0xff pattern:$0x75316420]
      %v504 = vld.sshfl [vmem:[#allocation1 + $0x8] sm:$0xff pattern:$0x75316420]
      %505 = vrot.lane.b32.xlu0 %v503, 15
      %v506 = vpop.permute.xlu0 %505
      %507 = vrot.lane.b32.xlu0 %v504, 15
      %v508 = vpop.permute.xlu0 %507
      %vm509 = vcmask 121856
      %v510 = vsel %vm509, %v506, %v508
      %v513 = vsel %vm509, %v500, %v506
      %s514 = scalar_lea.vmem %s5, 2
      %v515 = vld [vmem:[%s514] ss:$8 sm:$0x3]
      %v517 = vperm.slane %v515, 0
      %v518 = vperm.slane %v515, 1
      %v521 = vmul.f32 %v513, %v517
      %v522 = vmul.f32 %v510, %v518
      %s523 = scalar_lea.vmem %s1, 16
      %v524 = vld [vmem:[%s523] sm:$0xff]
      %v526 = vsel %vm309, %v524, 0
      %v529 = vsel %vm313, %v521, 0
      %v532 = vsel %vm313, %v522, 0
      %534 = vmatpush.msra.mxu0 0.0
      %535 = vmatpush.msra.mxu0 0.0
      %536 = vmatpush.msra.mxu0 0.0
      %537 = vmatpush.msra.mxu0 0.0
      %538 = vmatpush.msra.mxu0 0.0
      %539 = vmatpush.msra.mxu0 0.0
      %540 = vmatpush.msra.mxu0 0.0
      %541 = vmatpush.msra.mxu0 0.0
      %542 = vmatpush.msra.mxu0 0.0
      %543 = vmatpush.msra.mxu0 0.0
      %544 = vmatpush.msra.mxu0 0.0
      %545 = vmatpush.msra.mxu0 0.0
      %546 = vmatpush.msra.mxu0 0.0
      %547 = vmatpush.msra.mxu0 0.0
      %548 = vmatpush.msra.mxu0 0.0
      %549 = vmatpush.msra.mxu0 %v529
      %550 = vmatmul.f32.gmra.mxu0 %v526
      %v551 = vpop.f32.mrf.mxu0
      %v552 = vadd.f32 0.0, %v551
      %553 = vdwg.mxu0
      %554 = vmatpush.msra.mxu0 0.0
      %555 = vmatpush.msra.mxu0 0.0
      %556 = vmatpush.msra.mxu0 0.0
      %557 = vmatpush.msra.mxu0 0.0
      %558 = vmatpush.msra.mxu0 0.0
      %559 = vmatpush.msra.mxu0 0.0
      %560 = vmatpush.msra.mxu0 0.0
      %561 = vmatpush.msra.mxu0 0.0
      %562 = vmatpush.msra.mxu0 0.0
      %563 = vmatpush.msra.mxu0 0.0
      %564 = vmatpush.msra.mxu0 0.0
      %565 = vmatpush.msra.mxu0 0.0
      %566 = vmatpush.msra.mxu0 0.0
      %567 = vmatpush.msra.mxu0 0.0
      %568 = vmatpush.msra.mxu0 0.0
      %569 = vmatpush.msra.mxu0 %v532
      %570 = vmatmul.f32.gmra.mxu0 %v526
      %v571 = vpop.f32.mrf.mxu0
      %v572 = vadd.f32 0.0, %v571
      %573 = vdwg.mxu0
      %v574 = vadd.f32 %v387, %v552
      %v575 = vadd.f32 %v407, %v572
      %s576 = scalar_lea.vmem %s2, 16
      %v577 = vld [vmem:[%s576] sm:$0xff]
      %v579 = vsel %vm309, %v577, 0
      %581 = vmatpush.msra.mxu0 0.0
      %582 = vmatpush.msra.mxu0 0.0
      %583 = vmatpush.msra.mxu0 0.0
      %584 = vmatpush.msra.mxu0 0.0
      %585 = vmatpush.msra.mxu0 0.0
      %586 = vmatpush.msra.mxu0 0.0
      %587 = vmatpush.msra.mxu0 0.0
      %588 = vmatpush.msra.mxu0 0.0
      %589 = vmatpush.msra.mxu0 0.0
      %590 = vmatpush.msra.mxu0 0.0
      %591 = vmatpush.msra.mxu0 0.0
      %592 = vmatpush.msra.mxu0 0.0
      %593 = vmatpush.msra.mxu0 0.0
      %594 = vmatpush.msra.mxu0 0.0
      %595 = vmatpush.msra.mxu0 0.0
      %596 = vmatpush.msra.mxu0 %v529
      %597 = vmatmul.f32.gmra.mxu0 %v579
      %v598 = vpop.f32.mrf.mxu0
      %v599 = vadd.f32 0.0, %v598
      %600 = vdwg.mxu0
      %601 = vmatpush.msra.mxu0 0.0
      %602 = vmatpush.msra.mxu0 0.0
      %603 = vmatpush.msra.mxu0 0.0
      %604 = vmatpush.msra.mxu0 0.0
      %605 = vmatpush.msra.mxu0 0.0
      %606 = vmatpush.msra.mxu0 0.0
      %607 = vmatpush.msra.mxu0 0.0
      %608 = vmatpush.msra.mxu0 0.0
      %609 = vmatpush.msra.mxu0 0.0
      %610 = vmatpush.msra.mxu0 0.0
      %611 = vmatpush.msra.mxu0 0.0
      %612 = vmatpush.msra.mxu0 0.0
      %613 = vmatpush.msra.mxu0 0.0
      %614 = vmatpush.msra.mxu0 0.0
      %615 = vmatpush.msra.mxu0 0.0
      %616 = vmatpush.msra.mxu0 %v532
      %617 = vmatmul.f32.gmra.mxu0 %v579
      %v618 = vpop.f32.mrf.mxu0
      %v619 = vadd.f32 0.0, %v618
      %620 = vdwg.mxu0
      %v621 = vadd.f32 %v475, %v599
      %v622 = vadd.f32 %v495, %v619
      %623 = vst [vmem:[#allocation1] ss:$2 sm:$0xff] %v252
      %v624 = vld.sshfl [vmem:[#allocation1 + $0x8] sm:$0xff pattern:$0x75316420]
      %625 = vrot.lane.b32.xlu0 %v624, 1
      %v626 = vpop.permute.xlu0 %625
      %628 = vst [vmem:[#allocation1] ss:$2 sm:$0xff] %v252
      %v629 = vld.sshfl [vmem:[#allocation1] sm:$0xff pattern:$0x75316420]
      %v630 = vld.sshfl [vmem:[#allocation1 + $0x8] sm:$0xff pattern:$0x75316420]
      %631 = vrot.lane.b32.xlu0 %v629, 1
      %v632 = vpop.permute.xlu0 %631
      %633 = vrot.lane.b32.xlu0 %v630, 1
      %v634 = vpop.permute.xlu0 %633
      %vm635 = vcmask 7168
      %v636 = vsel %vm635, %v632, %v634
      %v639 = vsel %vm635, %v626, %v632
      %s640 = scalar_lea.vmem %s5, 3
      %v641 = vld [vmem:[%s640] ss:$8 sm:$0x3]
      %v643 = vperm.slane %v641, 0
      %v644 = vperm.slane %v641, 1
      %v647 = vmul.f32 %v639, %v643
      %v648 = vmul.f32 %v636, %v644
      %s649 = scalar_lea.vmem %s1, 24
      %v650 = vld [vmem:[%s649] sm:$0xff]
      %v652 = vsel %vm309, %v650, 0
      %v655 = vsel %vm313, %v647, 0
      %v658 = vsel %vm313, %v648, 0
      %660 = vmatpush.msra.mxu0 0.0
      %661 = vmatpush.msra.mxu0 0.0
      %662 = vmatpush.msra.mxu0 0.0
      %663 = vmatpush.msra.mxu0 0.0
      %664 = vmatpush.msra.mxu0 0.0
      %665 = vmatpush.msra.mxu0 0.0
      %666 = vmatpush.msra.mxu0 0.0
      %667 = vmatpush.msra.mxu0 0.0
      %668 = vmatpush.msra.mxu0 0.0
      %669 = vmatpush.msra.mxu0 0.0
      %670 = vmatpush.msra.mxu0 0.0
      %671 = vmatpush.msra.mxu0 0.0
      %672 = vmatpush.msra.mxu0 0.0
      %673 = vmatpush.msra.mxu0 0.0
      %674 = vmatpush.msra.mxu0 0.0
      %675 = vmatpush.msra.mxu0 %v655
      %676 = vmatmul.f32.gmra.mxu0 %v652
      %v677 = vpop.f32.mrf.mxu0
      %v678 = vadd.f32 0.0, %v677
      %679 = vdwg.mxu0
      %680 = vmatpush.msra.mxu0 0.0
      %681 = vmatpush.msra.mxu0 0.0
      %682 = vmatpush.msra.mxu0 0.0
      %683 = vmatpush.msra.mxu0 0.0
      %684 = vmatpush.msra.mxu0 0.0
      %685 = vmatpush.msra.mxu0 0.0
      %686 = vmatpush.msra.mxu0 0.0
      %687 = vmatpush.msra.mxu0 0.0
      %688 = vmatpush.msra.mxu0 0.0
      %689 = vmatpush.msra.mxu0 0.0
      %690 = vmatpush.msra.mxu0 0.0
      %691 = vmatpush.msra.mxu0 0.0
      %692 = vmatpush.msra.mxu0 0.0
      %693 = vmatpush.msra.mxu0 0.0
      %694 = vmatpush.msra.mxu0 0.0
      %695 = vmatpush.msra.mxu0 %v658
      %696 = vmatmul.f32.gmra.mxu0 %v652
      %v697 = vpop.f32.mrf.mxu0
      %v698 = vadd.f32 0.0, %v697
      %699 = vdwg.mxu0
      %v700 = vadd.f32 %v574, %v678
      %v701 = vadd.f32 %v575, %v698
      %s702 = scalar_lea.vmem %s2, 24
      %v703 = vld [vmem:[%s702] sm:$0xff]
      %v705 = vsel %vm309, %v703, 0
      %707 = vmatpush.msra.mxu0 0.0
      %708 = vmatpush.msra.mxu0 0.0
      %709 = vmatpush.msra.mxu0 0.0
      %710 = vmatpush.msra.mxu0 0.0
      %711 = vmatpush.msra.mxu0 0.0
      %712 = vmatpush.msra.mxu0 0.0
      %713 = vmatpush.msra.mxu0 0.0
      %714 = vmatpush.msra.mxu0 0.0
      %715 = vmatpush.msra.mxu0 0.0
      %716 = vmatpush.msra.mxu0 0.0
      %717 = vmatpush.msra.mxu0 0.0
      %718 = vmatpush.msra.mxu0 0.0
      %719 = vmatpush.msra.mxu0 0.0
      %720 = vmatpush.msra.mxu0 0.0
      %721 = vmatpush.msra.mxu0 0.0
      %722 = vmatpush.msra.mxu0 %v655
      %723 = vmatmul.f32.gmra.mxu0 %v705
      %v724 = vpop.f32.mrf.mxu0
      %v725 = vadd.f32 0.0, %v724
      %726 = vdwg.mxu0
      %727 = vmatpush.msra.mxu0 0.0
      %728 = vmatpush.msra.mxu0 0.0
      %729 = vmatpush.msra.mxu0 0.0
      %730 = vmatpush.msra.mxu0 0.0
      %731 = vmatpush.msra.mxu0 0.0
      %732 = vmatpush.msra.mxu0 0.0
      %733 = vmatpush.msra.mxu0 0.0
      %734 = vmatpush.msra.mxu0 0.0
      %735 = vmatpush.msra.mxu0 0.0
      %736 = vmatpush.msra.mxu0 0.0
      %737 = vmatpush.msra.mxu0 0.0
      %738 = vmatpush.msra.mxu0 0.0
      %739 = vmatpush.msra.mxu0 0.0
      %740 = vmatpush.msra.mxu0 0.0
      %741 = vmatpush.msra.mxu0 0.0
      %742 = vmatpush.msra.mxu0 %v658
      %743 = vmatmul.f32.gmra.mxu0 %v705
      %v744 = vpop.f32.mrf.mxu0
      %v745 = vadd.f32 0.0, %v744
      %746 = vdwg.mxu0
      %v747 = vadd.f32 %v621, %v725
      %v748 = vadd.f32 %v622, %v745
      %s749 = scalar_lea.vmem %s5, 4
      %v750 = vld [vmem:[%s749] ss:$8 sm:$0x3]
      %v752 = vperm.slane %v750, 0
      %v753 = vperm.slane %v750, 1
      %v754 = vrot.slane %v753, 4
      %v755 = vsel %vm313, %v752, %v754
      %v757 = vmul.f32 %v252, %v755
      %s758 = scalar_lea.vmem %s1, 32
      %v759 = vld [vmem:[%s758] sm:$0xff]
      %761 = vst [vmem:[#allocation1] ss:$2 sm:$0xff] %v757
      %v762 = vld.sshfl [vmem:[#allocation1] sm:$0xff pattern:$0x75316420]
      %v763 = vld.sshfl [vmem:[#allocation1 + $0x8] sm:$0xff pattern:$0x75316420]
      %v765 = vsel %vm309, %v759, 0
      %v767 = vsel %vm313, %v762, 0
      %v769 = vsel %vm313, %v763, 0
      %771 = vmatpush.msra.mxu0 0.0
      %772 = vmatpush.msra.mxu0 0.0
      %773 = vmatpush.msra.mxu0 0.0
      %774 = vmatpush.msra.mxu0 0.0
      %775 = vmatpush.msra.mxu0 0.0
      %776 = vmatpush.msra.mxu0 0.0
      %777 = vmatpush.msra.mxu0 0.0
      %778 = vmatpush.msra.mxu0 0.0
      %779 = vmatpush.msra.mxu0 0.0
      %780 = vmatpush.msra.mxu0 0.0
      %781 = vmatpush.msra.mxu0 0.0
      %782 = vmatpush.msra.mxu0 0.0
      %783 = vmatpush.msra.mxu0 0.0
      %784 = vmatpush.msra.mxu0 0.0
      %785 = vmatpush.msra.mxu0 0.0
      %786 = vmatpush.msra.mxu0 %v767
      %787 = vmatmul.f32.gmra.mxu0 %v765
      %v788 = vpop.f32.mrf.mxu0
      %v789 = vadd.f32 0.0, %v788
      %790 = vdwg.mxu0
      %791 = vmatpush.msra.mxu0 0.0
      %792 = vmatpush.msra.mxu0 0.0
      %793 = vmatpush.msra.mxu0 0.0
      %794 = vmatpush.msra.mxu0 0.0
      %795 = vmatpush.msra.mxu0 0.0
      %796 = vmatpush.msra.mxu0 0.0
      %797 = vmatpush.msra.mxu0 0.0
      %798 = vmatpush.msra.mxu0 0.0
      %799 = vmatpush.msra.mxu0 0.0
      %800 = vmatpush.msra.mxu0 0.0
      %801 = vmatpush.msra.mxu0 0.0
      %802 = vmatpush.msra.mxu0 0.0
      %803 = vmatpush.msra.mxu0 0.0
      %804 = vmatpush.msra.mxu0 0.0
      %805 = vmatpush.msra.mxu0 0.0
      %806 = vmatpush.msra.mxu0 %v769
      %807 = vmatmul.f32.gmra.mxu0 %v765
      %v808 = vpop.f32.mrf.mxu0
      %v809 = vadd.f32 0.0, %v808
      %810 = vdwg.mxu0
      %v811 = vadd.f32 %v700, %v789
      %v812 = vadd.f32 %v701, %v809
      %s813 = scalar_lea.vmem %s2, 32
      %v814 = vld [vmem:[%s813] sm:$0xff]
      %815 = vst [vmem:[#allocation1] ss:$2 sm:$0xff] %v757
      %v816 = vld.sshfl [vmem:[#allocation1] sm:$0xff pattern:$0x75316420]
      %v817 = vld.sshfl [vmem:[#allocation1 + $0x8] sm:$0xff pattern:$0x75316420]
      %v819 = vsel %vm309, %v814, 0
      %v821 = vsel %vm313, %v816, 0
      %v823 = vsel %vm313, %v817, 0
      %825 = vmatpush.msra.mxu0 0.0
      %826 = vmatpush.msra.mxu0 0.0
      %827 = vmatpush.msra.mxu0 0.0
      %828 = vmatpush.msra.mxu0 0.0
      %829 = vmatpush.msra.mxu0 0.0
      %830 = vmatpush.msra.mxu0 0.0
      %831 = vmatpush.msra.mxu0 0.0
      %832 = vmatpush.msra.mxu0 0.0
      %833 = vmatpush.msra.mxu0 0.0
      %834 = vmatpush.msra.mxu0 0.0
      %835 = vmatpush.msra.mxu0 0.0
      %836 = vmatpush.msra.mxu0 0.0
      %837 = vmatpush.msra.mxu0 0.0
      %838 = vmatpush.msra.mxu0 0.0
      %839 = vmatpush.msra.mxu0 0.0
      %840 = vmatpush.msra.mxu0 %v821
      %841 = vmatmul.f32.gmra.mxu0 %v819
      %v842 = vpop.f32.mrf.mxu0
      %v843 = vadd.f32 0.0, %v842
      %844 = vdwg.mxu0
      %845 = vmatpush.msra.mxu0 0.0
      %846 = vmatpush.msra.mxu0 0.0
      %847 = vmatpush.msra.mxu0 0.0
      %848 = vmatpush.msra.mxu0 0.0
      %849 = vmatpush.msra.mxu0 0.0
      %850 = vmatpush.msra.mxu0 0.0
      %851 = vmatpush.msra.mxu0 0.0
      %852 = vmatpush.msra.mxu0 0.0
      %853 = vmatpush.msra.mxu0 0.0
      %854 = vmatpush.msra.mxu0 0.0
      %855 = vmatpush.msra.mxu0 0.0
      %856 = vmatpush.msra.mxu0 0.0
      %857 = vmatpush.msra.mxu0 0.0
      %858 = vmatpush.msra.mxu0 0.0
      %859 = vmatpush.msra.mxu0 0.0
      %860 = vmatpush.msra.mxu0 %v823
      %861 = vmatmul.f32.gmra.mxu0 %v819
      %v862 = vpop.f32.mrf.mxu0
      %v863 = vadd.f32 0.0, %v862
      %864 = vdwg.mxu0
      %v865 = vadd.f32 %v747, %v843
      %v866 = vadd.f32 %v748, %v863
      %867 = vst [vmem:[#allocation1] ss:$2 sm:$0xff] %v252
      %v868 = vld.sshfl [vmem:[#allocation1] sm:$0xff pattern:$0x75316420]
      %v869 = vld.sshfl [vmem:[#allocation1 + $0x8] sm:$0xff pattern:$0x75316420]
      %870 = vrot.lane.b32.xlu0 %v868, 127
      %v871 = vpop.permute.xlu0 %870
      %872 = vrot.lane.b32.xlu0 %v869, 127
      %v873 = vpop.permute.xlu0 %872
      %vm874 = vcmask 1039360
      %v875 = vsel %vm874, %v871, %v873
      %878 = vst [vmem:[#allocation1] ss:$2 sm:$0xff] %v252
      %v879 = vld.sshfl [vmem:[#allocation1] sm:$0xff pattern:$0x75316420]
      %880 = vrot.lane.b32.xlu0 %v879, 127
      %v881 = vpop.permute.xlu0 %880
      %v883 = vsel %vm874, %v873, %v881
      %s884 = scalar_lea.vmem %s5, 5
      %v885 = vld [vmem:[%s884] ss:$8 sm:$0x3]
      %v887 = vperm.slane %v885, 0
      %v888 = vperm.slane %v885, 1
      %v891 = vmul.f32 %v875, %v887
      %v892 = vmul.f32 %v883, %v888
      %s893 = scalar_lea.vmem %s1, 40
      %v894 = vld [vmem:[%s893] sm:$0xff]
      %v896 = vsel %vm309, %v894, 0
      %v899 = vsel %vm313, %v891, 0
      %v902 = vsel %vm313, %v892, 0
      %904 = vmatpush.msra.mxu0 0.0
      %905 = vmatpush.msra.mxu0 0.0
      %906 = vmatpush.msra.mxu0 0.0
      %907 = vmatpush.msra.mxu0 0.0
      %908 = vmatpush.msra.mxu0 0.0
      %909 = vmatpush.msra.mxu0 0.0
      %910 = vmatpush.msra.mxu0 0.0
      %911 = vmatpush.msra.mxu0 0.0
      %912 = vmatpush.msra.mxu0 0.0
      %913 = vmatpush.msra.mxu0 0.0
      %914 = vmatpush.msra.mxu0 0.0
      %915 = vmatpush.msra.mxu0 0.0
      %916 = vmatpush.msra.mxu0 0.0
      %917 = vmatpush.msra.mxu0 0.0
      %918 = vmatpush.msra.mxu0 0.0
      %919 = vmatpush.msra.mxu0 %v899
      %920 = vmatmul.f32.gmra.mxu0 %v896
      %v921 = vpop.f32.mrf.mxu0
      %v922 = vadd.f32 0.0, %v921
      %923 = vdwg.mxu0
      %924 = vmatpush.msra.mxu0 0.0
      %925 = vmatpush.msra.mxu0 0.0
      %926 = vmatpush.msra.mxu0 0.0
      %927 = vmatpush.msra.mxu0 0.0
      %928 = vmatpush.msra.mxu0 0.0
      %929 = vmatpush.msra.mxu0 0.0
      %930 = vmatpush.msra.mxu0 0.0
      %931 = vmatpush.msra.mxu0 0.0
      %932 = vmatpush.msra.mxu0 0.0
      %933 = vmatpush.msra.mxu0 0.0
      %934 = vmatpush.msra.mxu0 0.0
      %935 = vmatpush.msra.mxu0 0.0
      %936 = vmatpush.msra.mxu0 0.0
      %937 = vmatpush.msra.mxu0 0.0
      %938 = vmatpush.msra.mxu0 0.0
      %939 = vmatpush.msra.mxu0 %v902
      %940 = vmatmul.f32.gmra.mxu0 %v896
      %v941 = vpop.f32.mrf.mxu0
      %v942 = vadd.f32 0.0, %v941
      %943 = vdwg.mxu0
      %v944 = vadd.f32 %v811, %v922
      %v945 = vadd.f32 %v812, %v942
      %s946 = scalar_lea.vmem %s2, 40
      %v947 = vld [vmem:[%s946] sm:$0xff]
      %v949 = vsel %vm309, %v947, 0
      %951 = vmatpush.msra.mxu0 0.0
      %952 = vmatpush.msra.mxu0 0.0
      %953 = vmatpush.msra.mxu0 0.0
      %954 = vmatpush.msra.mxu0 0.0
      %955 = vmatpush.msra.mxu0 0.0
      %956 = vmatpush.msra.mxu0 0.0
      %957 = vmatpush.msra.mxu0 0.0
      %958 = vmatpush.msra.mxu0 0.0
      %959 = vmatpush.msra.mxu0 0.0
      %960 = vmatpush.msra.mxu0 0.0
      %961 = vmatpush.msra.mxu0 0.0
      %962 = vmatpush.msra.mxu0 0.0
      %963 = vmatpush.msra.mxu0 0.0
      %964 = vmatpush.msra.mxu0 0.0
      %965 = vmatpush.msra.mxu0 0.0
      %966 = vmatpush.msra.mxu0 %v899
      %967 = vmatmul.f32.gmra.mxu0 %v949
      %v968 = vpop.f32.mrf.mxu0
      %v969 = vadd.f32 0.0, %v968
      %970 = vdwg.mxu0
      %971 = vmatpush.msra.mxu0 0.0
      %972 = vmatpush.msra.mxu0 0.0
      %973 = vmatpush.msra.mxu0 0.0
      %974 = vmatpush.msra.mxu0 0.0
      %975 = vmatpush.msra.mxu0 0.0
      %976 = vmatpush.msra.mxu0 0.0
      %977 = vmatpush.msra.mxu0 0.0
      %978 = vmatpush.msra.mxu0 0.0
      %979 = vmatpush.msra.mxu0 0.0
      %980 = vmatpush.msra.mxu0 0.0
      %981 = vmatpush.msra.mxu0 0.0
      %982 = vmatpush.msra.mxu0 0.0
      %983 = vmatpush.msra.mxu0 0.0
      %984 = vmatpush.msra.mxu0 0.0
      %985 = vmatpush.msra.mxu0 0.0
      %986 = vmatpush.msra.mxu0 %v902
      %987 = vmatmul.f32.gmra.mxu0 %v949
      %v988 = vpop.f32.mrf.mxu0
      %v989 = vadd.f32 0.0, %v988
      %990 = vdwg.mxu0
      %v991 = vadd.f32 %v865, %v969
      %v992 = vadd.f32 %v866, %v989
      %993 = vst [vmem:[#allocation1] ss:$2 sm:$0xff] %v252
      %v994 = vld.sshfl [vmem:[#allocation1] sm:$0xff pattern:$0x75316420]
      %v995 = vld.sshfl [vmem:[#allocation1 + $0x8] sm:$0xff pattern:$0x75316420]
      %996 = vrot.lane.b32.xlu0 %v994, 113
      %v997 = vpop.permute.xlu0 %996
      %998 = vrot.lane.b32.xlu0 %v995, 113
      %v999 = vpop.permute.xlu0 %998
      %vm1000 = vcmask 924672
      %v1001 = vsel %vm1000, %v997, %v999
      %1004 = vst [vmem:[#allocation1] ss:$2 sm:$0xff] %v252
      %v1005 = vld.sshfl [vmem:[#allocation1] sm:$0xff pattern:$0x75316420]
      %1006 = vrot.lane.b32.xlu0 %v1005, 113
      %v1007 = vpop.permute.xlu0 %1006
      %v1009 = vsel %vm1000, %v999, %v1007
      %s1010 = scalar_lea.vmem %s5, 6
      %v1011 = vld [vmem:[%s1010] ss:$8 sm:$0x3]
      %v1013 = vperm.slane %v1011, 0
      %v1014 = vperm.slane %v1011, 1
      %v1017 = vmul.f32 %v1001, %v1013
      %v1018 = vmul.f32 %v1009, %v1014
      %s1019 = scalar_lea.vmem %s1, 48
      %v1020 = vld [vmem:[%s1019] sm:$0xff]
      %v1022 = vsel %vm309, %v1020, 0
      %v1025 = vsel %vm313, %v1017, 0
      %v1028 = vsel %vm313, %v1018, 0
      %1030 = vmatpush.msra.mxu0 0.0
      %1031 = vmatpush.msra.mxu0 0.0
      %1032 = vmatpush.msra.mxu0 0.0
      %1033 = vmatpush.msra.mxu0 0.0
      %1034 = vmatpush.msra.mxu0 0.0
      %1035 = vmatpush.msra.mxu0 0.0
      %1036 = vmatpush.msra.mxu0 0.0
      %1037 = vmatpush.msra.mxu0 0.0
      %1038 = vmatpush.msra.mxu0 0.0
      %1039 = vmatpush.msra.mxu0 0.0
      %1040 = vmatpush.msra.mxu0 0.0
      %1041 = vmatpush.msra.mxu0 0.0
      %1042 = vmatpush.msra.mxu0 0.0
      %1043 = vmatpush.msra.mxu0 0.0
      %1044 = vmatpush.msra.mxu0 0.0
      %1045 = vmatpush.msra.mxu0 %v1025
      %1046 = vmatmul.f32.gmra.mxu0 %v1022
      %v1047 = vpop.f32.mrf.mxu0
      %v1048 = vadd.f32 0.0, %v1047
      %1049 = vdwg.mxu0
      %1050 = vmatpush.msra.mxu0 0.0
      %1051 = vmatpush.msra.mxu0 0.0
      %1052 = vmatpush.msra.mxu0 0.0
      %1053 = vmatpush.msra.mxu0 0.0
      %1054 = vmatpush.msra.mxu0 0.0
      %1055 = vmatpush.msra.mxu0 0.0
      %1056 = vmatpush.msra.mxu0 0.0
      %1057 = vmatpush.msra.mxu0 0.0
      %1058 = vmatpush.msra.mxu0 0.0
      %1059 = vmatpush.msra.mxu0 0.0
      %1060 = vmatpush.msra.mxu0 0.0
      %1061 = vmatpush.msra.mxu0 0.0
      %1062 = vmatpush.msra.mxu0 0.0
      %1063 = vmatpush.msra.mxu0 0.0
      %1064 = vmatpush.msra.mxu0 0.0
      %1065 = vmatpush.msra.mxu0 %v1028
      %1066 = vmatmul.f32.gmra.mxu0 %v1022
      %v1067 = vpop.f32.mrf.mxu0
      %v1068 = vadd.f32 0.0, %v1067
      %1069 = vdwg.mxu0
      %v1070 = vadd.f32 %v944, %v1048
      %v1071 = vadd.f32 %v945, %v1068
      %s1072 = scalar_lea.vmem %s2, 48
      %v1073 = vld [vmem:[%s1072] sm:$0xff]
      %v1075 = vsel %vm309, %v1073, 0
      %1077 = vmatpush.msra.mxu0 0.0
      %1078 = vmatpush.msra.mxu0 0.0
      %1079 = vmatpush.msra.mxu0 0.0
      %1080 = vmatpush.msra.mxu0 0.0
      %1081 = vmatpush.msra.mxu0 0.0
      %1082 = vmatpush.msra.mxu0 0.0
      %1083 = vmatpush.msra.mxu0 0.0
      %1084 = vmatpush.msra.mxu0 0.0
      %1085 = vmatpush.msra.mxu0 0.0
      %1086 = vmatpush.msra.mxu0 0.0
      %1087 = vmatpush.msra.mxu0 0.0
      %1088 = vmatpush.msra.mxu0 0.0
      %1089 = vmatpush.msra.mxu0 0.0
      %1090 = vmatpush.msra.mxu0 0.0
      %1091 = vmatpush.msra.mxu0 0.0
      %1092 = vmatpush.msra.mxu0 %v1025
      %1093 = vmatmul.f32.gmra.mxu0 %v1075
      %v1094 = vpop.f32.mrf.mxu0
      %v1095 = vadd.f32 0.0, %v1094
      %1096 = vdwg.mxu0
      %1097 = vmatpush.msra.mxu0 0.0
      %1098 = vmatpush.msra.mxu0 0.0
      %1099 = vmatpush.msra.mxu0 0.0
      %1100 = vmatpush.msra.mxu0 0.0
      %1101 = vmatpush.msra.mxu0 0.0
      %1102 = vmatpush.msra.mxu0 0.0
      %1103 = vmatpush.msra.mxu0 0.0
      %1104 = vmatpush.msra.mxu0 0.0
      %1105 = vmatpush.msra.mxu0 0.0
      %1106 = vmatpush.msra.mxu0 0.0
      %1107 = vmatpush.msra.mxu0 0.0
      %1108 = vmatpush.msra.mxu0 0.0
      %1109 = vmatpush.msra.mxu0 0.0
      %1110 = vmatpush.msra.mxu0 0.0
      %1111 = vmatpush.msra.mxu0 0.0
      %1112 = vmatpush.msra.mxu0 %v1028
      %1113 = vmatmul.f32.gmra.mxu0 %v1075
      %v1114 = vpop.f32.mrf.mxu0
      %v1115 = vadd.f32 0.0, %v1114
      %1116 = vdwg.mxu0
      %v1117 = vadd.f32 %v991, %v1095
      %v1118 = vadd.f32 %v992, %v1115
      %1119 = vst [vmem:[#allocation1] ss:$2 sm:$0xff] %v252
      %v1120 = vld.sshfl [vmem:[#allocation1] sm:$0xff pattern:$0x75316420]
      %v1121 = vld.sshfl [vmem:[#allocation1 + $0x8] sm:$0xff pattern:$0x75316420]
      %1122 = vrot.lane.b32.xlu0 %v1120, 112
      %v1123 = vpop.permute.xlu0 %1122
      %1124 = vrot.lane.b32.xlu0 %v1121, 112
      %v1125 = vpop.permute.xlu0 %1124
      %vm1126 = vcmask 916480
      %v1127 = vsel %vm1126, %v1123, %v1125
      %1130 = vst [vmem:[#allocation1] ss:$2 sm:$0xff] %v252
      %v1131 = vld.sshfl [vmem:[#allocation1] sm:$0xff pattern:$0x75316420]
      %1132 = vrot.lane.b32.xlu0 %v1131, 112
      %v1133 = vpop.permute.xlu0 %1132
      %v1135 = vsel %vm1126, %v1125, %v1133
      %s1136 = scalar_lea.vmem %s5, 7
      %v1137 = vld [vmem:[%s1136] ss:$8 sm:$0x3]
      %v1139 = vperm.slane %v1137, 0
      %v1140 = vperm.slane %v1137, 1
      %v1143 = vmul.f32 %v1127, %v1139
      %v1144 = vmul.f32 %v1135, %v1140
      %s1145 = scalar_lea.vmem %s1, 56
      %v1146 = vld [vmem:[%s1145] sm:$0xff]
      %v1148 = vsel %vm309, %v1146, 0
      %v1151 = vsel %vm313, %v1143, 0
      %v1154 = vsel %vm313, %v1144, 0
      %1156 = vmatpush.msra.mxu0 0.0
      %1157 = vmatpush.msra.mxu0 0.0
      %1158 = vmatpush.msra.mxu0 0.0
      %1159 = vmatpush.msra.mxu0 0.0
      %1160 = vmatpush.msra.mxu0 0.0
      %1161 = vmatpush.msra.mxu0 0.0
      %1162 = vmatpush.msra.mxu0 0.0
      %1163 = vmatpush.msra.mxu0 0.0
      %1164 = vmatpush.msra.mxu0 0.0
      %1165 = vmatpush.msra.mxu0 0.0
      %1166 = vmatpush.msra.mxu0 0.0
      %1167 = vmatpush.msra.mxu0 0.0
      %1168 = vmatpush.msra.mxu0 0.0
      %1169 = vmatpush.msra.mxu0 0.0
      %1170 = vmatpush.msra.mxu0 0.0
      %1171 = vmatpush.msra.mxu0 %v1151
      %1172 = vmatmul.f32.gmra.mxu0 %v1148
      %v1173 = vpop.f32.mrf.mxu0
      %v1174 = vadd.f32 0.0, %v1173
      %1175 = vdwg.mxu0
      %1176 = vmatpush.msra.mxu0 0.0
      %1177 = vmatpush.msra.mxu0 0.0
      %1178 = vmatpush.msra.mxu0 0.0
      %1179 = vmatpush.msra.mxu0 0.0
      %1180 = vmatpush.msra.mxu0 0.0
      %1181 = vmatpush.msra.mxu0 0.0
      %1182 = vmatpush.msra.mxu0 0.0
      %1183 = vmatpush.msra.mxu0 0.0
      %1184 = vmatpush.msra.mxu0 0.0
      %1185 = vmatpush.msra.mxu0 0.0
      %1186 = vmatpush.msra.mxu0 0.0
      %1187 = vmatpush.msra.mxu0 0.0
      %1188 = vmatpush.msra.mxu0 0.0
      %1189 = vmatpush.msra.mxu0 0.0
      %1190 = vmatpush.msra.mxu0 0.0
      %1191 = vmatpush.msra.mxu0 %v1154
      %1192 = vmatmul.f32.gmra.mxu0 %v1148
      %v1193 = vpop.f32.mrf.mxu0
      %v1194 = vadd.f32 0.0, %v1193
      %1195 = vdwg.mxu0
      %v1196 = vadd.f32 %v1070, %v1174
      %v1197 = vadd.f32 %v1071, %v1194
      %s1198 = scalar_lea.vmem %s2, 56
      %v1199 = vld [vmem:[%s1198] sm:$0xff]
      %v1201 = vsel %vm309, %v1199, 0
      %1203 = vmatpush.msra.mxu0 0.0
      %1204 = vmatpush.msra.mxu0 0.0
      %1205 = vmatpush.msra.mxu0 0.0
      %1206 = vmatpush.msra.mxu0 0.0
      %1207 = vmatpush.msra.mxu0 0.0
      %1208 = vmatpush.msra.mxu0 0.0
      %1209 = vmatpush.msra.mxu0 0.0
      %1210 = vmatpush.msra.mxu0 0.0
      %1211 = vmatpush.msra.mxu0 0.0
      %1212 = vmatpush.msra.mxu0 0.0
      %1213 = vmatpush.msra.mxu0 0.0
      %1214 = vmatpush.msra.mxu0 0.0
      %1215 = vmatpush.msra.mxu0 0.0
      %1216 = vmatpush.msra.mxu0 0.0
      %1217 = vmatpush.msra.mxu0 0.0
      %1218 = vmatpush.msra.mxu0 %v1151
      %1219 = vmatmul.f32.gmra.mxu0 %v1201
      %v1220 = vpop.f32.mrf.mxu0
      %v1221 = vadd.f32 0.0, %v1220
      %1222 = vdwg.mxu0
      %1223 = vmatpush.msra.mxu0 0.0
      %1224 = vmatpush.msra.mxu0 0.0
      %1225 = vmatpush.msra.mxu0 0.0
      %1226 = vmatpush.msra.mxu0 0.0
      %1227 = vmatpush.msra.mxu0 0.0
      %1228 = vmatpush.msra.mxu0 0.0
      %1229 = vmatpush.msra.mxu0 0.0
      %1230 = vmatpush.msra.mxu0 0.0
      %1231 = vmatpush.msra.mxu0 0.0
      %1232 = vmatpush.msra.mxu0 0.0
      %1233 = vmatpush.msra.mxu0 0.0
      %1234 = vmatpush.msra.mxu0 0.0
      %1235 = vmatpush.msra.mxu0 0.0
      %1236 = vmatpush.msra.mxu0 0.0
      %1237 = vmatpush.msra.mxu0 0.0
      %1238 = vmatpush.msra.mxu0 %v1154
      %1239 = vmatmul.f32.gmra.mxu0 %v1201
      %v1240 = vpop.f32.mrf.mxu0
      %v1241 = vadd.f32 0.0, %v1240
      %1242 = vdwg.mxu0
      %v1243 = vadd.f32 %v1117, %v1221
      %v1244 = vadd.f32 %v1118, %v1241
      %1245 = vst [vmem:[#allocation1] ss:$2 sm:$0xff] %v252
      %v1246 = vld.sshfl [vmem:[#allocation1] sm:$0xff pattern:$0x75316420]
      %v1247 = vld.sshfl [vmem:[#allocation1 + $0x8] sm:$0xff pattern:$0x75316420]
      %1248 = vrot.lane.b32.xlu0 %v1246, 111
      %v1249 = vpop.permute.xlu0 %1248
      %1250 = vrot.lane.b32.xlu0 %v1247, 111
      %v1251 = vpop.permute.xlu0 %1250
      %vm1252 = vcmask 908288
      %v1253 = vsel %vm1252, %v1249, %v1251
      %1256 = vst [vmem:[#allocation1] ss:$2 sm:$0xff] %v252
      %v1257 = vld.sshfl [vmem:[#allocation1] sm:$0xff pattern:$0x75316420]
      %1258 = vrot.lane.b32.xlu0 %v1257, 111
      %v1259 = vpop.permute.xlu0 %1258
      %v1261 = vsel %vm1252, %v1251, %v1259
      %s1262 = scalar_lea.vmem %s5, 16
      %v1263 = vld [vmem:[%s1262] ss:$8 sm:$0x3]
      %v1265 = vperm.slane %v1263, 0
      %v1266 = vperm.slane %v1263, 1
      %v1269 = vmul.f32 %v1253, %v1265
      %v1270 = vmul.f32 %v1261, %v1266
      %s1271 = scalar_lea.vmem %s1, 64
      %v1272 = vld [vmem:[%s1271] sm:$0xff]
      %v1274 = vsel %vm309, %v1272, 0
      %v1277 = vsel %vm313, %v1269, 0
      %v1280 = vsel %vm313, %v1270, 0
      %1282 = vmatpush.msra.mxu0 0.0
      %1283 = vmatpush.msra.mxu0 0.0
      %1284 = vmatpush.msra.mxu0 0.0
      %1285 = vmatpush.msra.mxu0 0.0
      %1286 = vmatpush.msra.mxu0 0.0
      %1287 = vmatpush.msra.mxu0 0.0
      %1288 = vmatpush.msra.mxu0 0.0
      %1289 = vmatpush.msra.mxu0 0.0
      %1290 = vmatpush.msra.mxu0 0.0
      %1291 = vmatpush.msra.mxu0 0.0
      %1292 = vmatpush.msra.mxu0 0.0
      %1293 = vmatpush.msra.mxu0 0.0
      %1294 = vmatpush.msra.mxu0 0.0
      %1295 = vmatpush.msra.mxu0 0.0
      %1296 = vmatpush.msra.mxu0 0.0
      %1297 = vmatpush.msra.mxu0 %v1277
      %1298 = vmatmul.f32.gmra.mxu0 %v1274
      %v1299 = vpop.f32.mrf.mxu0
      %v1300 = vadd.f32 0.0, %v1299
      %1301 = vdwg.mxu0
      %1302 = vmatpush.msra.mxu0 0.0
      %1303 = vmatpush.msra.mxu0 0.0
      %1304 = vmatpush.msra.mxu0 0.0
      %1305 = vmatpush.msra.mxu0 0.0
      %1306 = vmatpush.msra.mxu0 0.0
      %1307 = vmatpush.msra.mxu0 0.0
      %1308 = vmatpush.msra.mxu0 0.0
      %1309 = vmatpush.msra.mxu0 0.0
      %1310 = vmatpush.msra.mxu0 0.0
      %1311 = vmatpush.msra.mxu0 0.0
      %1312 = vmatpush.msra.mxu0 0.0
      %1313 = vmatpush.msra.mxu0 0.0
      %1314 = vmatpush.msra.mxu0 0.0
      %1315 = vmatpush.msra.mxu0 0.0
      %1316 = vmatpush.msra.mxu0 0.0
      %1317 = vmatpush.msra.mxu0 %v1280
      %1318 = vmatmul.f32.gmra.mxu0 %v1274
      %v1319 = vpop.f32.mrf.mxu0
      %v1320 = vadd.f32 0.0, %v1319
      %1321 = vdwg.mxu0
      %v1322 = vadd.f32 %v1196, %v1300
      %v1323 = vadd.f32 %v1197, %v1320
      %s1324 = scalar_lea.vmem %s2, 64
      %v1325 = vld [vmem:[%s1324] sm:$0xff]
      %v1327 = vsel %vm309, %v1325, 0
      %1329 = vmatpush.msra.mxu0 0.0
      %1330 = vmatpush.msra.mxu0 0.0
      %1331 = vmatpush.msra.mxu0 0.0
      %1332 = vmatpush.msra.mxu0 0.0
      %1333 = vmatpush.msra.mxu0 0.0
      %1334 = vmatpush.msra.mxu0 0.0
      %1335 = vmatpush.msra.mxu0 0.0
      %1336 = vmatpush.msra.mxu0 0.0
      %1337 = vmatpush.msra.mxu0 0.0
      %1338 = vmatpush.msra.mxu0 0.0
      %1339 = vmatpush.msra.mxu0 0.0
      %1340 = vmatpush.msra.mxu0 0.0
      %1341 = vmatpush.msra.mxu0 0.0
      %1342 = vmatpush.msra.mxu0 0.0
      %1343 = vmatpush.msra.mxu0 0.0
      %1344 = vmatpush.msra.mxu0 %v1277
      %1345 = vmatmul.f32.gmra.mxu0 %v1327
      %v1346 = vpop.f32.mrf.mxu0
      %v1347 = vadd.f32 0.0, %v1346
      %1348 = vdwg.mxu0
      %1349 = vmatpush.msra.mxu0 0.0
      %1350 = vmatpush.msra.mxu0 0.0
      %1351 = vmatpush.msra.mxu0 0.0
      %1352 = vmatpush.msra.mxu0 0.0
      %1353 = vmatpush.msra.mxu0 0.0
      %1354 = vmatpush.msra.mxu0 0.0
      %1355 = vmatpush.msra.mxu0 0.0
      %1356 = vmatpush.msra.mxu0 0.0
      %1357 = vmatpush.msra.mxu0 0.0
      %1358 = vmatpush.msra.mxu0 0.0
      %1359 = vmatpush.msra.mxu0 0.0
      %1360 = vmatpush.msra.mxu0 0.0
      %1361 = vmatpush.msra.mxu0 0.0
      %1362 = vmatpush.msra.mxu0 0.0
      %1363 = vmatpush.msra.mxu0 0.0
      %1364 = vmatpush.msra.mxu0 %v1280
      %1365 = vmatmul.f32.gmra.mxu0 %v1327
      %v1366 = vpop.f32.mrf.mxu0
      %v1367 = vadd.f32 0.0, %v1366
      %1368 = vdwg.mxu0
      %v1369 = vadd.f32 %v1243, %v1347
      %v1370 = vadd.f32 %v1244, %v1367
      %v1371 = vld [vmem:[%s3] sm:$0xff]
      %1373 = vset.pattern.permute.xlu0 0
      %1374 = vperm.xlu0 %1373, %v1371
      %v1375 = vpop.permute.xlu0 %1374
      %v1377 = vadd.f32 %v1322, %v1375
      %v1378 = vadd.f32 %v1323, %v1375
      %v1379 = vld [vmem:[%s4] sm:$0xff]
      %1381 = vset.pattern.permute.xlu0 0
      %1382 = vperm.xlu0 %1381, %v1379
      %v1383 = vpop.permute.xlu0 %1382
      %v1385 = vadd.f32 %v1369, %v1383
      %v1386 = vadd.f32 %v1370, %v1383
      %v1387 = vmax.f32 %v1377, %v1385
      %v1388 = vmax.f32 %v1378, %v1386
      %1389 = vst [vmem:[%s251] sm:$0xff] %v1387
      %1390 = vst [vmem:[%s251 + $0x8] sm:$0xff] %v1388
      %p1391 = scmp.lt.s32.totalorder %s17, 1
      %s1392 = scalar_select %p1391, %s17, 1
      %s1393 = smul.addr %s1392, 2
      %s1394 = smul.addr %s1393, 8
      %s1395 = scalar_lea.vmem %s6, %s1394
      // Predicated region
      $region45: #{mfm_conv2d.1} parent=43 // pred_check
        %p1396 = pneg %p166
      $region46: #{mfm_conv2d.1} parent=43 // pred_check_branch
        %1398 = sbr.rel (%p1396) target = $region48
      $region47: #{mfm_conv2d.1} parent=43 // pred_region
        _
      $region48: #{mfm_conv2d.1} parent=43 // pred_fallthru
        _
    $region44: #{mfm_conv2d.1} parent=5 // pred_fallthru
      _
    %p1399 = scmp.le.s32.totalorder 2, %s12
    // Predicated region
    $region49: #{mfm_conv2d.1} parent=5 // pred_check
      %p1400 = pneg %p1399
    $region50: #{mfm_conv2d.1} parent=5 // pred_check_branch
      %1402 = sbr.rel (%p1400) target = $region52
    $region51: #{mfm_conv2d.1} parent=5 // pred_region
      %s1403 = ssub.s32 %s12, 2
      // Predicated region
      $region53: #{mfm_conv2d.1} parent=51 // pred_check
        %p1404 = pneg %p172
      $region54: #{mfm_conv2d.1} parent=51 // pred_check_branch
        %1406 = sbr.rel (%p1404) target = $region56
      $region55: #{mfm_conv2d.1} parent=51 // pred_region
        %p1407 = scmp.lt.s32.totalorder %s18, 1
        %s1408 = scalar_select %p1407, %s18, 1
        %s1409 = smul.addr %s1408, 2
        %s1410 = smul.addr %s1409, 8
        %s1411 = scalar_lea.vmem %s6, %s1410
      $region56: #{mfm_conv2d.1} parent=51 // pred_fallthru
        _
    $region52: #{mfm_conv2d.1} parent=5 // pred_fallthru
      _
  $region6: #{mfm_conv2d.1} parent=0 // loop_footer
    %s16 = sadd.s32 1, %s12
  $region7: #{mfm_conv2d.1} parent=0 // loop_footer_branch
    %11 = sbr.rel target = $region3
  $region8: #{mfm_conv2d.1} parent=0 // loop_exit
    _

</llo_original>
